<compile_context>
chip_gen: v5e
topology: v5e:2x2
jax: 0.10.0
libtpu: 0.0.40
codegen_flags: <defaults>
</compile_context>

<pallas_src>
import jax
import jax.numpy as jnp
from jax import lax
from jax.experimental import pallas as pl
from jax.experimental.pallas import tpu as pltpu

BN_EPS = 1e-5
H, W = 2, 4                      # spatial size implied by the encoder
C_IN, C_MID, C_CODE = 128, 64, 8
W1, W2 = W - 1, W - 2            # conv1 / conv2 output widths (3, 2)
NPOS = H * W1                    # conv1 output positions per sample (6)


def _round_up(v, m):
    return -(-v // m) * m


def _select_tiling():
    """Per-generation batch-block cap + scoped-VMEM limit.

    Bigger blocks amortize the ~0.35us/step pipeline overhead and lengthen
    DMA bursts; v5e/v6e have 128 MiB VMEM per core, v7x only 64 MiB, so the
    tiling is re-derived per generation.  The fallback (1024, 48 MiB) is safe
    on every generation (per-block footprint at NB=1024 is only ~10 MiB).
    """
    try:
        vmem_bytes = pltpu.get_tpu_info().vmem_capacity_bytes
    except Exception:
        vmem_bytes = 64 * 1024 * 1024
    if vmem_bytes >= 96 * 1024 * 1024:          # v5e / v6e (128 MiB VMEM)
        return 2048, 96 * 1024 * 1024
    return 1024, 48 * 1024 * 1024                # v7x / unknown


NB_CAP, VMEM_LIMIT = _select_tiling()

# MXU matmul flops per sample (2*K*Cout per output position).
_STATS_FLOPS_PER_SAMPLE = H * W1 * 2 * (2 * C_IN) * C_MID             # conv1
_FWD_FLOPS_PER_SAMPLE = (
    H * W2 * 2 * (2 * C_MID) * C_CODE                                 # conv2
    + H * 2 * C_MID * (C_CODE + 2 * C_CODE + C_CODE)                  # deconv1
    + H * 2 * C_IN * (C_MID + 2 * C_MID + 2 * C_MID + C_MID))         # deconv2


def stats_kernel(x_ref, w1s_ref, stats_ref, y1_ref):
    """Pass 1: bias-free conv1 (bf16 MXU, f32 accum).

    Emits the pre-BN conv1 activations y1 (bf16) so pass 2 never re-reads x
    or recomputes conv1, plus per-block sum / sum-of-squares (f32).
    The zero-padded batch rows produce exactly-zero conv outputs, so the
    statistics (divided by the true sample count in the wrapper) stay exact.
    """
    w1s = w1s_ref[...]                                   # [2*C_IN, C_MID] bf16
    acc_s = None
    acc_q = None
    for h in range(H):
        for wo in range(W1):
            # conv1 taps fused: 128-lane-aligned concat -> one K=256 matmul.
            lhs = jnp.concatenate(
                [x_ref[wo, h, :, :], x_ref[wo + 1, h, :, :]], axis=-1)
            y = jnp.dot(lhs, w1s, preferred_element_type=jnp.float32)  # [Nb,64] f32
            y1_ref[h * W1 + wo, :, :] = y.astype(y1_ref.dtype)
            # Elementwise accumulation (VPU); single XLU reduce at the end.
            acc_s = y if acc_s is None else acc_s + y
            acc_q = y * y if acc_q is None else acc_q + y * y
    # Lane-dense packed output: lanes [0:64) = sum, lanes [64:128) = sum(x^2).
    stats_ref[...] = jnp.concatenate(
        [jnp.sum(acc_s, axis=0, keepdims=True),
         jnp.sum(acc_q, axis=0, keepdims=True)], axis=-1)[None]


def forward_kernel(y1_ref, bn_scale_ref, bn_shift_ref,
                   w2a_ref, w2b_ref, b2_ref,
                   dw1a_ref, dw1b_ref, db1_ref,
                   dw2a_ref, dw2b_ref, db2_ref,
                   out_ref):
    """Pass 2: BN+ReLU on stored conv1 activations, conv2, fused
    pool/unpool, deconv1, deconv2; bf16 lane-dense output stores."""
    bn_scale = bn_scale_ref[...]                         # [1, 64] f32
    bn_shift = bn_shift_ref[...]
    w2a, w2b, b2 = w2a_ref[...], w2b_ref[...], b2_ref[...]
    dw1a, dw1b, db1 = dw1a_ref[...], dw1b_ref[...], db1_ref[...]
    dw2a, dw2b, db2 = dw2a_ref[...], dw2b_ref[...], db2_ref[...]

    def mm(a, w):
        # bf16 operands (MXU native rate), f32 accumulation.
        return jnp.dot(a.astype(jnp.bfloat16), w,
                       preferred_element_type=jnp.float32)

    # ---------------- encoder ----------------
    # Training-mode BN (full-batch stats from pass 1) folded to scale/shift;
    # elementwise math kept f32 (v5e VPU has no bf16), applied to the stored
    # pre-BN conv1 activations.
    def bn_relu(p):
        y = y1_ref[p, :, :].astype(jnp.float32) * bn_scale + bn_shift
        return jnp.maximum(y, 0.0)

    y1r = [[bn_relu(h * W1 + wo) for wo in range(W1)] for h in range(H)]

    # Conv2 (1,2): two tap matmuls summed (no 64->128 lane concat), +bias+ReLU.
    y2 = [[None] * W2 for _ in range(H)]
    for h in range(H):
        for wo in range(W2):
            y2[h][wo] = jnp.maximum(
                mm(y1r[h][wo], w2a) + mm(y1r[h][wo + 1], w2b) + b2, 0.0)

    # MaxPool2d(2) -> encoded [Nb, 8]; Flatten/Unflatten are identity;
    # MaxUnpool2d(2) scatters the max to its first-occurrence argmax slot.
    p00, p01, p10, p11 = y2[0][0], y2[0][1], y2[1][0], y2[1][1]
    m = jnp.maximum(jnp.maximum(p00, p01), jnp.maximum(p10, p11))
    z = jnp.zeros_like(m)
    u = [[None, None], [None, None]]
    u[0][0] = jnp.where(p00 >= m, m, z)
    u[0][1] = jnp.where((p01 >= m) & (p00 < m), m, z)
    u[1][0] = jnp.where((p10 >= m) & (p00 < m) & (p01 < m), m, z)
    u[1][1] = jnp.where((p11 >= m) & (p00 < m) & (p01 < m) & (p10 < m), m, z)

    # ---------------- decoder ----------------
    # ConvTranspose2d(8, 64, (1,2)): boundary columns single-tap, middle
    # column two tap matmuls summed.
    d1 = [[None] * (W2 + 1) for _ in range(H)]
    for h in range(H):
        d1[h][0] = mm(u[h][0], dw1a) + db1
        d1[h][1] = mm(u[h][1], dw1a) + mm(u[h][0], dw1b) + db1
        d1[h][2] = mm(u[h][1], dw1b) + db1

    # ConvTranspose2d(64, 128, (1,2)): per output column only the live taps;
    # interior columns are two summed tap matmuls; bf16 lane-dense stores.
    for h in range(H):
        out_ref[0, h, :, :] = (mm(d1[h][0], dw2a) + db2).astype(out_ref.dtype)
        out_ref[1, h, :, :] = (
            mm(d1[h][1], dw2a) + mm(d1[h][0], dw2b) + db2).astype(out_ref.dtype)
        out_ref[2, h, :, :] = (
            mm(d1[h][2], dw2a) + mm(d1[h][1], dw2b) + db2).astype(out_ref.dtype)
        out_ref[3, h, :, :] = (mm(d1[h][2], dw2b) + db2).astype(out_ref.dtype)


def make_params(key):
    """Deterministic synthetic parameters.

    Torch <-> here mapping (kernel (1,2) split into two taps):
      Conv2d weight   [Cout,Cin,1,2]:  wXa = W[:,:,0,0].T, wXb = W[:,:,0,1].T
      ConvT2d weight  [Cin,Cout,1,2]:  dwXa = W[:,:,0,0],  dwXb = W[:,:,0,1]
      biases / BN affine stored as [1, C] for TPU-friendly broadcasting.
    (b1 is kept for interface parity but is exactly absorbed by training-mode
    BatchNorm, so it never enters the kernels.)
    """
    ks = jax.random.split(key, 14)

    def w(k, shape, scale):
        return (scale * jax.random.normal(k, shape)).astype(jnp.float32)

    return dict(
        w1a=w(ks[0], (128, 64), 0.05), w1b=w(ks[1], (128, 64), 0.05),
        b1=w(ks[2], (1, 64), 0.05),
        bn_g=(1.0 + 0.1 * jax.random.normal(ks[3], (1, 64))).astype(jnp.float32),
        bn_b=w(ks[4], (1, 64), 0.1),
        w2a=w(ks[5], (64, 8), 0.1), w2b=w(ks[6], (64, 8), 0.1),
        b2=w(ks[7], (1, 8), 0.1),
        dw1a=w(ks[8], (8, 64), 0.1), dw1b=w(ks[9], (8, 64), 0.1),
        db1=w(ks[10], (1, 64), 0.1),
        dw2a=w(ks[11], (64, 128), 0.05), dw2b=w(ks[12], (64, 128), 0.05),
        db2=w(ks[13], (1, 128), 0.05),
    )


@jax.jit
def net_forward(x_nchw, params):
    n, c, h, w = x_nchw.shape
    assert (c, h, w) == (C_IN, H, W), "encoder requires [N, 128, 2, 4] input"

    # Single boundary transpose NCHW -> [W, H, N, C], cast to bf16 (halves
    # every HBM byte the kernels touch).
    x_k = jnp.transpose(x_nchw.astype(jnp.bfloat16), (3, 2, 0, 1))

    # Batch tiling: blocks of nb samples (multiple of 8, capped per gen).
    # Split into >=2 blocks whenever n > 8 so the "parallel" grid axis shards
    # across both v7x TensorCores; pad N up to a multiple of nb.  Zero-padded
    # samples contribute exactly 0 to the bias-free conv1 sums, so the BN
    # statistics (divided by the true count) stay exact.
    nb = min(NB_CAP, max(8, _round_up(-(-n // 2), 8)))
    n_pad = _round_up(n, nb)
    if n_pad != n:
        x_k = jnp.pad(x_k, ((0, 0), (0, 0), (0, n_pad - n), (0, 0)))
    n_blocks = n_pad // nb

    # Stack the conv1 taps along K once, outside the kernels; all matmul
    # weights go to bf16 (f32 accumulation in-kernel).
    w1s = jnp.concatenate([params["w1a"], params["w1b"]],
                          axis=0).astype(jnp.bfloat16)          # [256, 64]
    w2a = params["w2a"].astype(jnp.bfloat16)
    w2b = params["w2b"].astype(jnp.bfloat16)
    dw1a = params["dw1a"].astype(jnp.bfloat16)
    dw1b = params["dw1b"].astype(jnp.bfloat16)
    dw2a = params["dw2a"].astype(jnp.bfloat16)
    dw2b = params["dw2b"].astype(jnp.bfloat16)

    cparams = pltpu.CompilerParams(dimension_semantics=("parallel",),
                                   vmem_limit_bytes=VMEM_LIMIT)

    x_spec = pl.BlockSpec((W, H, nb, C_IN), lambda i: (0, 0, i, 0))
    y1_spec = pl.BlockSpec((NPOS, nb, C_MID), lambda i: (0, i, 0))

    def const_spec(shape):
        # Weights / vectors: constant block index -> stays VMEM-resident.
        return pl.BlockSpec(shape, lambda i: (0,) * len(shape))

    # ---- pass 1: conv1 activations (bf16) + full-batch BN statistics ----
    stats, y1 = pl.pallas_call(
        stats_kernel,
        out_shape=(jax.ShapeDtypeStruct((n_blocks, 1, 128), jnp.float32),
                   jax.ShapeDtypeStruct((NPOS, n_pad, C_MID), jnp.bfloat16)),
        grid=(n_blocks,),
        in_specs=[x_spec, const_spec((2 * C_IN, C_MID))],
        out_specs=(pl.BlockSpec((1, 1, 128), lambda i: (i, 0, 0)), y1_spec),
        compiler_params=cparams,
        cost_estimate=pl.CostEstimate(
            flops=n_pad * _STATS_FLOPS_PER_SAMPLE,
            transcendentals=0,
            bytes_accessed=(n_pad * (H * W * C_IN * 2 + NPOS * C_MID * 2)
                            + 2 * C_IN * C_MID * 2 + n_blocks * 512)),
    )(x_k, w1s)

    # Full-batch biased statistics of y1 = conv1(x) + b1.  The bias only
    # shifts the mean, so it cancels exactly; fold mean/var + BN affine into
    # a single f32 scale/shift pair applied in pass 2.
    count = jnp.float32(n * H * W1)
    totals = jnp.sum(stats[:, 0, :], axis=0)                      # [128] f32
    mean = totals[:C_MID] / count
    var = jnp.maximum(totals[C_MID:] / count - mean * mean, 0.0)
    inv = lax.rsqrt(var + BN_EPS)
    bn_scale = (params["bn_g"][0] * inv)[None, :]                 # [1, 64] f32
    bn_shift = (params["bn_b"][0] - mean * params["bn_g"][0] * inv)[None, :]

    # ---- pass 2: fused encoder tail / decoder (consumes y1, not x) ----
    out_k = pl.pallas_call(
        forward_kernel,
        out_shape=jax.ShapeDtypeStruct((W, H, n_pad, C_IN), jnp.bfloat16),
        grid=(n_blocks,),
        in_specs=[
            y1_spec,                          # pre-BN conv1 activations
            const_spec((1, C_MID)),           # bn_scale (f32)
            const_spec((1, C_MID)),           # bn_shift (f32)
            const_spec((C_MID, C_CODE)),      # w2a
            const_spec((C_MID, C_CODE)),      # w2b
            const_spec((1, C_CODE)),          # b2 (f32)
            const_spec((C_CODE, C_MID)),      # dw1a
            const_spec((C_CODE, C_MID)),      # dw1b
            const_spec((1, C_MID)),           # db1 (f32)
            const_spec((C_MID, C_IN)),        # dw2a
            const_spec((C_MID, C_IN)),        # dw2b
            const_spec((1, C_IN)),            # db2 (f32)
        ],
        out_specs=pl.BlockSpec((W, H, nb, C_IN), lambda i: (0, 0, i, 0)),
        compiler_params=cparams,
        cost_estimate=pl.CostEstimate(
            flops=n_pad * _FWD_FLOPS_PER_SAMPLE,
            transcendentals=0,
            bytes_accessed=(n_pad * (NPOS * C_MID * 2 + H * W * C_IN * 2)
                            + 60_000)),
    )(y1, bn_scale, bn_shift, w2a, w2b, params["b2"],
      dw1a, dw1b, params["db1"], dw2a, dw2b, params["db2"])

    # Drop batch padding, return to PyTorch NCHW, and restore the reference
    # module's f32 output dtype (kernel-side HBM writes stay bf16).
    return jnp.transpose(out_k[:, :, :n, :], (2, 3, 1, 0)).astype(jnp.float32)


if __name__ == "__main__":
    key = jax.random.PRNGKey(0)
    kx, kp = jax.random.split(key)

    # The PyTorch forward implies x: [N, 128, 2, 4] (NCHW).
    x = jax.random.normal(kx, (2, 128, 2, 4), dtype=jnp.float32)
    params = make_params(kp)

    # TODO(synk): the reference forward calls print(encoded.size()); that
    # host-side print is omitted here (the encoded shape is (N, 8, 1, 1)).
    out = jax.block_until_ready(net_forward(x, params))

    assert out.shape == (2, 128, 2, 4), out.shape
    assert bool(jnp.all(jnp.isfinite(out)))
    print("KERNEL_OK")
</pallas_src>

<mosaic_0001>
module attributes {stable_mosaic.version = 11 : i64} {
  func.func @stats_kernel(%arg0: i32, %arg1: memref<4x2x8x128xbf16, #tpu.memory_space<vmem>>, %arg2: memref<256x64xbf16, #tpu.memory_space<vmem>>, %arg3: memref<1x1x128xf32, #tpu.memory_space<vmem>>, %arg4: memref<6x8x64xbf16, #tpu.memory_space<vmem>>) attributes {dimension_semantics = [#tpu.dimension_semantics<parallel>], iteration_bounds = array<i64: 1>, scalar_prefetch = 0 : i64, scratch_operands = 0 : i64, tpu.core_type = #tpu.core_type<tc>, window_params = [{transform_indices = @transform_0, window_bounds = array<i64: 4, 2, 8, 128>}, {pipeline_mode = #tpu.pipeline_mode<synchronous>, transform_indices = @transform_1, window_bounds = array<i64: 256, 64>}, {transform_indices = @transform_2, window_bounds = array<i64: 1, 1, 128>}, {transform_indices = @transform_3, window_bounds = array<i64: 6, 8, 64>}]} {
    %c0 = arith.constant 0 : index
    %c0_0 = arith.constant 0 : index
    %0 = vector.load %arg2[%c0, %c0_0] : memref<256x64xbf16, #tpu.memory_space<vmem>>, vector<256x64xbf16>
    %c0_1 = arith.constant 0 : index
    %c0_2 = arith.constant 0 : index
    %c0_3 = arith.constant 0 : index
    %c0_4 = arith.constant 0 : index
    %1 = vector.load %arg1[%c0_1, %c0_2, %c0_3, %c0_4] : memref<4x2x8x128xbf16, #tpu.memory_space<vmem>>, vector<1x1x8x128xbf16>
    %2 = vector.shape_cast %1 : vector<1x1x8x128xbf16> to vector<8x128xbf16>
    %c1 = arith.constant 1 : index
    %c0_5 = arith.constant 0 : index
    %c0_6 = arith.constant 0 : index
    %c0_7 = arith.constant 0 : index
    %3 = vector.load %arg1[%c1, %c0_5, %c0_6, %c0_7] : memref<4x2x8x128xbf16, #tpu.memory_space<vmem>>, vector<1x1x8x128xbf16>
    %4 = vector.shape_cast %3 : vector<1x1x8x128xbf16> to vector<8x128xbf16>
    %5 = tpu.concatenate %2, %4 in 1 : vector<8x128xbf16>, vector<8x128xbf16> -> vector<8x256xbf16>
    %cst = arith.constant dense<0.000000e+00> : vector<8x64xf32>
    %6 = tpu.matmul %5, %0, %cst {dimension_numbers = #tpu.dot_dimension_numbers<[1], [0], [0], [1], [0, 0, 1, 1], [], []>} : vector<8x256xbf16>, vector<256x64xbf16>, vector<8x64xf32> -> vector<8x64xf32>
    %7 = arith.truncf %6 : vector<8x64xf32> to vector<8x64xbf16>
    %c0_8 = arith.constant 0 : index
    %c0_9 = arith.constant 0 : index
    %c0_10 = arith.constant 0 : index
    %8 = vector.load %arg4[%c0_8, %c0_9, %c0_10] : memref<6x8x64xbf16, #tpu.memory_space<vmem>>, vector<1x8x64xbf16>
    %9 = vector.shape_cast %8 : vector<1x8x64xbf16> to vector<8x64xbf16>
    %10 = vector.shape_cast %7 : vector<8x64xbf16> to vector<1x8x64xbf16>
    tpu.vector_store %arg4[%c0_8, %c0_9, %c0_10], %10 {strides = array<i32>} : memref<6x8x64xbf16, #tpu.memory_space<vmem>>, vector<1x8x64xbf16>,
    %11 = arith.mulf %6, %6 : vector<8x64xf32>
    %c1_11 = arith.constant 1 : index
    %c0_12 = arith.constant 0 : index
    %c0_13 = arith.constant 0 : index
    %c0_14 = arith.constant 0 : index
    %12 = vector.load %arg1[%c1_11, %c0_12, %c0_13, %c0_14] : memref<4x2x8x128xbf16, #tpu.memory_space<vmem>>, vector<1x1x8x128xbf16>
    %13 = vector.shape_cast %12 : vector<1x1x8x128xbf16> to vector<8x128xbf16>
    %c2 = arith.constant 2 : index
    %c0_15 = arith.constant 0 : index
    %c0_16 = arith.constant 0 : index
    %c0_17 = arith.constant 0 : index
    %14 = vector.load %arg1[%c2, %c0_15, %c0_16, %c0_17] : memref<4x2x8x128xbf16, #tpu.memory_space<vmem>>, vector<1x1x8x128xbf16>
    %15 = vector.shape_cast %14 : vector<1x1x8x128xbf16> to vector<8x128xbf16>
    %16 = tpu.concatenate %13, %15 in 1 : vector<8x128xbf16>, vector<8x128xbf16> -> vector<8x256xbf16>
    %cst_18 = arith.constant dense<0.000000e+00> : vector<8x64xf32>
    %17 = tpu.matmul %16, %0, %cst_18 {dimension_numbers = #tpu.dot_dimension_numbers<[1], [0], [0], [1], [0, 0, 1, 1], [], []>} : vector<8x256xbf16>, vector<256x64xbf16>, vector<8x64xf32> -> vector<8x64xf32>
    %18 = arith.truncf %17 : vector<8x64xf32> to vector<8x64xbf16>
    %c1_19 = arith.constant 1 : index
    %c0_20 = arith.constant 0 : index
    %c0_21 = arith.constant 0 : index
    %19 = vector.load %arg4[%c1_19, %c0_20, %c0_21] : memref<6x8x64xbf16, #tpu.memory_space<vmem>>, vector<1x8x64xbf16>
    %20 = vector.shape_cast %19 : vector<1x8x64xbf16> to vector<8x64xbf16>
    %21 = vector.shape_cast %18 : vector<8x64xbf16> to vector<1x8x64xbf16>
    tpu.vector_store %arg4[%c1_19, %c0_20, %c0_21], %21 {strides = array<i32>} : memref<6x8x64xbf16, #tpu.memory_space<vmem>>, vector<1x8x64xbf16>,
    %22 = arith.addf %6, %17 : vector<8x64xf32>
    %23 = arith.mulf %17, %17 : vector<8x64xf32>
    %24 = arith.addf %11, %23 : vector<8x64xf32>
    %c2_22 = arith.constant 2 : index
    %c0_23 = arith.constant 0 : index
    %c0_24 = arith.constant 0 : index
    %c0_25 = arith.constant 0 : index
    %25 = vector.load %arg1[%c2_22, %c0_23, %c0_24, %c0_25] : memref<4x2x8x128xbf16, #tpu.memory_space<vmem>>, vector<1x1x8x128xbf16>
    %26 = vector.shape_cast %25 : vector<1x1x8x128xbf16> to vector<8x128xbf16>
    %c3 = arith.constant 3 : index
    %c0_26 = arith.constant 0 : index
    %c0_27 = arith.constant 0 : index
    %c0_28 = arith.constant 0 : index
    %27 = vector.load %arg1[%c3, %c0_26, %c0_27, %c0_28] : memref<4x2x8x128xbf16, #tpu.memory_space<vmem>>, vector<1x1x8x128xbf16>
    %28 = vector.shape_cast %27 : vector<1x1x8x128xbf16> to vector<8x128xbf16>
    %29 = tpu.concatenate %26, %28 in 1 : vector<8x128xbf16>, vector<8x128xbf16> -> vector<8x256xbf16>
    %cst_29 = arith.constant dense<0.000000e+00> : vector<8x64xf32>
    %30 = tpu.matmul %29, %0, %cst_29 {dimension_numbers = #tpu.dot_dimension_numbers<[1], [0], [0], [1], [0, 0, 1, 1], [], []>} : vector<8x256xbf16>, vector<256x64xbf16>, vector<8x64xf32> -> vector<8x64xf32>
    %31 = arith.truncf %30 : vector<8x64xf32> to vector<8x64xbf16>
    %c2_30 = arith.constant 2 : index
    %c0_31 = arith.constant 0 : index
    %c0_32 = arith.constant 0 : index
    %32 = vector.load %arg4[%c2_30, %c0_31, %c0_32] : memref<6x8x64xbf16, #tpu.memory_space<vmem>>, vector<1x8x64xbf16>
    %33 = vector.shape_cast %32 : vector<1x8x64xbf16> to vector<8x64xbf16>
    %34 = vector.shape_cast %31 : vector<8x64xbf16> to vector<1x8x64xbf16>
    tpu.vector_store %arg4[%c2_30, %c0_31, %c0_32], %34 {strides = array<i32>} : memref<6x8x64xbf16, #tpu.memory_space<vmem>>, vector<1x8x64xbf16>,
    %35 = arith.addf %22, %30 : vector<8x64xf32>
    %36 = arith.mulf %30, %30 : vector<8x64xf32>
    %37 = arith.addf %24, %36 : vector<8x64xf32>
    %c0_33 = arith.constant 0 : index
    %c1_34 = arith.constant 1 : index
    %c0_35 = arith.constant 0 : index
    %c0_36 = arith.constant 0 : index
    %38 = vector.load %arg1[%c0_33, %c1_34, %c0_35, %c0_36] : memref<4x2x8x128xbf16, #tpu.memory_space<vmem>>, vector<1x1x8x128xbf16>
    %39 = vector.shape_cast %38 : vector<1x1x8x128xbf16> to vector<8x128xbf16>
    %c1_37 = arith.constant 1 : index
    %c1_38 = arith.constant 1 : index
    %c0_39 = arith.constant 0 : index
    %c0_40 = arith.constant 0 : index
    %40 = vector.load %arg1[%c1_37, %c1_38, %c0_39, %c0_40] : memref<4x2x8x128xbf16, #tpu.memory_space<vmem>>, vector<1x1x8x128xbf16>
    %41 = vector.shape_cast %40 : vector<1x1x8x128xbf16> to vector<8x128xbf16>
    %42 = tpu.concatenate %39, %41 in 1 : vector<8x128xbf16>, vector<8x128xbf16> -> vector<8x256xbf16>
    %cst_41 = arith.constant dense<0.000000e+00> : vector<8x64xf32>
    %43 = tpu.matmul %42, %0, %cst_41 {dimension_numbers = #tpu.dot_dimension_numbers<[1], [0], [0], [1], [0, 0, 1, 1], [], []>} : vector<8x256xbf16>, vector<256x64xbf16>, vector<8x64xf32> -> vector<8x64xf32>
    %44 = arith.truncf %43 : vector<8x64xf32> to vector<8x64xbf16>
    %c3_42 = arith.constant 3 : index
    %c0_43 = arith.constant 0 : index
    %c0_44 = arith.constant 0 : index
    %45 = vector.load %arg4[%c3_42, %c0_43, %c0_44] : memref<6x8x64xbf16, #tpu.memory_space<vmem>>, vector<1x8x64xbf16>
    %46 = vector.shape_cast %45 : vector<1x8x64xbf16> to vector<8x64xbf16>
    %47 = vector.shape_cast %44 : vector<8x64xbf16> to vector<1x8x64xbf16>
    tpu.vector_store %arg4[%c3_42, %c0_43, %c0_44], %47 {strides = array<i32>} : memref<6x8x64xbf16, #tpu.memory_space<vmem>>, vector<1x8x64xbf16>,
    %48 = arith.addf %35, %43 : vector<8x64xf32>
    %49 = arith.mulf %43, %43 : vector<8x64xf32>
    %50 = arith.addf %37, %49 : vector<8x64xf32>
    %c1_45 = arith.constant 1 : index
    %c1_46 = arith.constant 1 : index
    %c0_47 = arith.constant 0 : index
    %c0_48 = arith.constant 0 : index
    %51 = vector.load %arg1[%c1_45, %c1_46, %c0_47, %c0_48] : memref<4x2x8x128xbf16, #tpu.memory_space<vmem>>, vector<1x1x8x128xbf16>
    %52 = vector.shape_cast %51 : vector<1x1x8x128xbf16> to vector<8x128xbf16>
    %c2_49 = arith.constant 2 : index
    %c1_50 = arith.constant 1 : index
    %c0_51 = arith.constant 0 : index
    %c0_52 = arith.constant 0 : index
    %53 = vector.load %arg1[%c2_49, %c1_50, %c0_51, %c0_52] : memref<4x2x8x128xbf16, #tpu.memory_space<vmem>>, vector<1x1x8x128xbf16>
    %54 = vector.shape_cast %53 : vector<1x1x8x128xbf16> to vector<8x128xbf16>
    %55 = tpu.concatenate %52, %54 in 1 : vector<8x128xbf16>, vector<8x128xbf16> -> vector<8x256xbf16>
    %cst_53 = arith.constant dense<0.000000e+00> : vector<8x64xf32>
    %56 = tpu.matmul %55, %0, %cst_53 {dimension_numbers = #tpu.dot_dimension_numbers<[1], [0], [0], [1], [0, 0, 1, 1], [], []>} : vector<8x256xbf16>, vector<256x64xbf16>, vector<8x64xf32> -> vector<8x64xf32>
    %57 = arith.truncf %56 : vector<8x64xf32> to vector<8x64xbf16>
    %c4 = arith.constant 4 : index
    %c0_54 = arith.constant 0 : index
    %c0_55 = arith.constant 0 : index
    %58 = vector.load %arg4[%c4, %c0_54, %c0_55] : memref<6x8x64xbf16, #tpu.memory_space<vmem>>, vector<1x8x64xbf16>
    %59 = vector.shape_cast %58 : vector<1x8x64xbf16> to vector<8x64xbf16>
    %60 = vector.shape_cast %57 : vector<8x64xbf16> to vector<1x8x64xbf16>
    tpu.vector_store %arg4[%c4, %c0_54, %c0_55], %60 {strides = array<i32>} : memref<6x8x64xbf16, #tpu.memory_space<vmem>>, vector<1x8x64xbf16>,
    %61 = arith.addf %48, %56 : vector<8x64xf32>
    %62 = arith.mulf %56, %56 : vector<8x64xf32>
    %63 = arith.addf %50, %62 : vector<8x64xf32>
    %c2_56 = arith.constant 2 : index
    %c1_57 = arith.constant 1 : index
    %c0_58 = arith.constant 0 : index
    %c0_59 = arith.constant 0 : index
    %64 = vector.load %arg1[%c2_56, %c1_57, %c0_58, %c0_59] : memref<4x2x8x128xbf16, #tpu.memory_space<vmem>>, vector<1x1x8x128xbf16>
    %65 = vector.shape_cast %64 : vector<1x1x8x128xbf16> to vector<8x128xbf16>
    %c3_60 = arith.constant 3 : index
    %c1_61 = arith.constant 1 : index
    %c0_62 = arith.constant 0 : index
    %c0_63 = arith.constant 0 : index
    %66 = vector.load %arg1[%c3_60, %c1_61, %c0_62, %c0_63] : memref<4x2x8x128xbf16, #tpu.memory_space<vmem>>, vector<1x1x8x128xbf16>
    %67 = vector.shape_cast %66 : vector<1x1x8x128xbf16> to vector<8x128xbf16>
    %68 = tpu.concatenate %65, %67 in 1 : vector<8x128xbf16>, vector<8x128xbf16> -> vector<8x256xbf16>
    %cst_64 = arith.constant dense<0.000000e+00> : vector<8x64xf32>
    %69 = tpu.matmul %68, %0, %cst_64 {dimension_numbers = #tpu.dot_dimension_numbers<[1], [0], [0], [1], [0, 0, 1, 1], [], []>} : vector<8x256xbf16>, vector<256x64xbf16>, vector<8x64xf32> -> vector<8x64xf32>
    %70 = arith.truncf %69 : vector<8x64xf32> to vector<8x64xbf16>
    %c5 = arith.constant 5 : index
    %c0_65 = arith.constant 0 : index
    %c0_66 = arith.constant 0 : index
    %71 = vector.load %arg4[%c5, %c0_65, %c0_66] : memref<6x8x64xbf16, #tpu.memory_space<vmem>>, vector<1x8x64xbf16>
    %72 = vector.shape_cast %71 : vector<1x8x64xbf16> to vector<8x64xbf16>
    %73 = vector.shape_cast %70 : vector<8x64xbf16> to vector<1x8x64xbf16>
    tpu.vector_store %arg4[%c5, %c0_65, %c0_66], %73 {strides = array<i32>} : memref<6x8x64xbf16, #tpu.memory_space<vmem>>, vector<1x8x64xbf16>,
    %74 = arith.addf %61, %69 : vector<8x64xf32>
    %75 = arith.mulf %69, %69 : vector<8x64xf32>
    %76 = arith.addf %63, %75 : vector<8x64xf32>
    %cst_67 = arith.constant dense<0.000000e+00> : vector<64xf32>
    %77 = vector.multi_reduction <add>, %74, %cst_67 [0] : vector<8x64xf32> to vector<64xf32>
    %78 = vector.shape_cast %77 : vector<64xf32> to vector<1x64xf32>
    %cst_68 = arith.constant dense<0.000000e+00> : vector<64xf32>
    %79 = vector.multi_reduction <add>, %76, %cst_68 [0] : vector<8x64xf32> to vector<64xf32>
    %80 = vector.shape_cast %79 : vector<64xf32> to vector<1x64xf32>
    %81 = tpu.concatenate %78, %80 in 1 : vector<1x64xf32>, vector<1x64xf32> -> vector<1x128xf32>
    %82 = vector.shape_cast %81 : vector<1x128xf32> to vector<1x1x128xf32>
    %c0_69 = arith.constant 0 : index
    %c0_70 = arith.constant 0 : index
    %c0_71 = arith.constant 0 : index
    %83 = vector.load %arg3[%c0_69, %c0_70, %c0_71] : memref<1x1x128xf32, #tpu.memory_space<vmem>>, vector<1x1x128xf32>
    tpu.vector_store %arg3[%c0_69, %c0_70, %c0_71], %82 {strides = array<i32>} : memref<1x1x128xf32, #tpu.memory_space<vmem>>, vector<1x1x128xf32>,
    return
  }
  func.func @transform_0(%arg0: i32) -> (i32, i32, i32, i32) {
    %c0_i32 = arith.constant 0 : i32
    %c0_i32_0 = arith.constant 0 : i32
    %c0_i32_1 = arith.constant 0 : i32
    %c0_i32_2 = arith.constant 0 : i32
    return %c0_i32, %c0_i32_0, %arg0, %c0_i32_1 : i32, i32, i32, i32
  }
  func.func @transform_1(%arg0: i32) -> (i32, i32) {
    %c0_i32 = arith.constant 0 : i32
    %c0_i32_0 = arith.constant 0 : i32
    %c0_i32_1 = arith.constant 0 : i32
    return %c0_i32, %c0_i32_0 : i32, i32
  }
  func.func @transform_2(%arg0: i32) -> (i32, i32, i32) {
    %c0_i32 = arith.constant 0 : i32
    %c0_i32_0 = arith.constant 0 : i32
    %c0_i32_1 = arith.constant 0 : i32
    return %arg0, %c0_i32, %c0_i32_0 : i32, i32, i32
  }
  func.func @transform_3(%arg0: i32) -> (i32, i32, i32) {
    %c0_i32 = arith.constant 0 : i32
    %c0_i32_0 = arith.constant 0 : i32
    %c0_i32_1 = arith.constant 0 : i32
    return %c0_i32, %arg0, %c0_i32_0 : i32, i32, i32
  }
}

module attributes {stable_mosaic.version = 11 : i64} {
  func.func @forward_kernel(%arg0: i32, %arg1: memref<6x8x64xbf16, #tpu.memory_space<vmem>>, %arg2: memref<1x64xf32, #tpu.memory_space<vmem>>, %arg3: memref<1x64xf32, #tpu.memory_space<vmem>>, %arg4: memref<64x8xbf16, #tpu.memory_space<vmem>>, %arg5: memref<64x8xbf16, #tpu.memory_space<vmem>>, %arg6: memref<1x8xf32, #tpu.memory_space<vmem>>, %arg7: memref<8x64xbf16, #tpu.memory_space<vmem>>, %arg8: memref<8x64xbf16, #tpu.memory_space<vmem>>, %arg9: memref<1x64xf32, #tpu.memory_space<vmem>>, %arg10: memref<64x128xbf16, #tpu.memory_space<vmem>>, %arg11: memref<64x128xbf16, #tpu.memory_space<vmem>>, %arg12: memref<1x128xf32, #tpu.memory_space<vmem>>, %arg13: memref<4x2x8x128xbf16, #tpu.memory_space<vmem>>) attributes {dimension_semantics = [#tpu.dimension_semantics<parallel>], iteration_bounds = array<i64: 1>, scalar_prefetch = 0 : i64, scratch_operands = 0 : i64, tpu.core_type = #tpu.core_type<tc>, window_params = [{transform_indices = @transform_0, window_bounds = array<i64: 6, 8, 64>}, {pipeline_mode = #tpu.pipeline_mode<synchronous>, transform_indices = @transform_1, window_bounds = array<i64: 1, 64>}, {pipeline_mode = #tpu.pipeline_mode<synchronous>, transform_indices = @transform_2, window_bounds = array<i64: 1, 64>}, {pipeline_mode = #tpu.pipeline_mode<synchronous>, transform_indices = @transform_3, window_bounds = array<i64: 64, 8>}, {pipeline_mode = #tpu.pipeline_mode<synchronous>, transform_indices = @transform_4, window_bounds = array<i64: 64, 8>}, {pipeline_mode = #tpu.pipeline_mode<synchronous>, transform_indices = @transform_5, window_bounds = array<i64: 1, 8>}, {pipeline_mode = #tpu.pipeline_mode<synchronous>, transform_indices = @transform_6, window_bounds = array<i64: 8, 64>}, {pipeline_mode = #tpu.pipeline_mode<synchronous>, transform_indices = @transform_7, window_bounds = array<i64: 8, 64>}, {pipeline_mode = #tpu.pipeline_mode<synchronous>, transform_indices = @transform_8, window_bounds = array<i64: 1, 64>}, {pipeline_mode = #tpu.pipeline_mode<synchronous>, transform_indices = @transform_9, window_bounds = array<i64: 64, 128>}, {pipeline_mode = #tpu.pipeline_mode<synchronous>, transform_indices = @transform_10, window_bounds = array<i64: 64, 128>}, {pipeline_mode = #tpu.pipeline_mode<synchronous>, transform_indices = @transform_11, window_bounds = array<i64: 1, 128>}, {transform_indices = @transform_12, window_bounds = array<i64: 4, 2, 8, 128>}]} {
    %c0 = arith.constant 0 : index
    %c0_0 = arith.constant 0 : index
    %0 = vector.load %arg2[%c0, %c0_0] : memref<1x64xf32, #tpu.memory_space<vmem>>, vector<1x64xf32>
    %c0_1 = arith.constant 0 : index
    %c0_2 = arith.constant 0 : index
    %1 = vector.load %arg3[%c0_1, %c0_2] : memref<1x64xf32, #tpu.memory_space<vmem>>, vector<1x64xf32>
    %c0_3 = arith.constant 0 : index
    %c0_4 = arith.constant 0 : index
    %2 = vector.load %arg4[%c0_3, %c0_4] : memref<64x8xbf16, #tpu.memory_space<vmem>>, vector<64x8xbf16>
    %c0_5 = arith.constant 0 : index
    %c0_6 = arith.constant 0 : index
    %3 = vector.load %arg5[%c0_5, %c0_6] : memref<64x8xbf16, #tpu.memory_space<vmem>>, vector<64x8xbf16>
    %c0_7 = arith.constant 0 : index
    %c0_8 = arith.constant 0 : index
    %4 = vector.load %arg6[%c0_7, %c0_8] : memref<1x8xf32, #tpu.memory_space<vmem>>, vector<1x8xf32>
    %c0_9 = arith.constant 0 : index
    %c0_10 = arith.constant 0 : index
    %5 = vector.load %arg7[%c0_9, %c0_10] : memref<8x64xbf16, #tpu.memory_space<vmem>>, vector<8x64xbf16>
    %c0_11 = arith.constant 0 : index
    %c0_12 = arith.constant 0 : index
    %6 = vector.load %arg8[%c0_11, %c0_12] : memref<8x64xbf16, #tpu.memory_space<vmem>>, vector<8x64xbf16>
    %c0_13 = arith.constant 0 : index
    %c0_14 = arith.constant 0 : index
    %7 = vector.load %arg9[%c0_13, %c0_14] : memref<1x64xf32, #tpu.memory_space<vmem>>, vector<1x64xf32>
    %c0_15 = arith.constant 0 : index
    %c0_16 = arith.constant 0 : index
    %8 = vector.load %arg10[%c0_15, %c0_16] : memref<64x128xbf16, #tpu.memory_space<vmem>>, vector<64x128xbf16>
    %c0_17 = arith.constant 0 : index
    %c0_18 = arith.constant 0 : index
    %9 = vector.load %arg11[%c0_17, %c0_18] : memref<64x128xbf16, #tpu.memory_space<vmem>>, vector<64x128xbf16>
    %c0_19 = arith.constant 0 : index
    %c0_20 = arith.constant 0 : index
    %10 = vector.load %arg12[%c0_19, %c0_20] : memref<1x128xf32, #tpu.memory_space<vmem>>, vector<1x128xf32>
    %c0_21 = arith.constant 0 : index
    %c0_22 = arith.constant 0 : index
    %c0_23 = arith.constant 0 : index
    %11 = vector.load %arg1[%c0_21, %c0_22, %c0_23] : memref<6x8x64xbf16, #tpu.memory_space<vmem>>, vector<1x8x64xbf16>
    %12 = vector.shape_cast %11 : vector<1x8x64xbf16> to vector<8x64xbf16>
    %13 = arith.extf %12 : vector<8x64xbf16> to vector<8x64xf32>
    %14 = vector.broadcast %0 : vector<1x64xf32> to vector<8x64xf32>
    %15 = arith.mulf %13, %14 : vector<8x64xf32>
    %16 = vector.broadcast %1 : vector<1x64xf32> to vector<8x64xf32>
    %17 = arith.addf %15, %16 : vector<8x64xf32>
    %cst = arith.constant 0.000000e+00 : f32
    %18 = vector.broadcast %cst : f32 to vector<8x64xf32>
    %19 = arith.maximumf %17, %18 : vector<8x64xf32>
    %c1 = arith.constant 1 : index
    %c0_24 = arith.constant 0 : index
    %c0_25 = arith.constant 0 : index
    %20 = vector.load %arg1[%c1, %c0_24, %c0_25] : memref<6x8x64xbf16, #tpu.memory_space<vmem>>, vector<1x8x64xbf16>
    %21 = vector.shape_cast %20 : vector<1x8x64xbf16> to vector<8x64xbf16>
    %22 = arith.extf %21 : vector<8x64xbf16> to vector<8x64xf32>
    %23 = vector.broadcast %0 : vector<1x64xf32> to vector<8x64xf32>
    %24 = arith.mulf %22, %23 : vector<8x64xf32>
    %25 = vector.broadcast %1 : vector<1x64xf32> to vector<8x64xf32>
    %26 = arith.addf %24, %25 : vector<8x64xf32>
    %cst_26 = arith.constant 0.000000e+00 : f32
    %27 = vector.broadcast %cst_26 : f32 to vector<8x64xf32>
    %28 = arith.maximumf %26, %27 : vector<8x64xf32>
    %c2 = arith.constant 2 : index
    %c0_27 = arith.constant 0 : index
    %c0_28 = arith.constant 0 : index
    %29 = vector.load %arg1[%c2, %c0_27, %c0_28] : memref<6x8x64xbf16, #tpu.memory_space<vmem>>, vector<1x8x64xbf16>
    %30 = vector.shape_cast %29 : vector<1x8x64xbf16> to vector<8x64xbf16>
    %31 = arith.extf %30 : vector<8x64xbf16> to vector<8x64xf32>
    %32 = vector.broadcast %0 : vector<1x64xf32> to vector<8x64xf32>
    %33 = arith.mulf %31, %32 : vector<8x64xf32>
    %34 = vector.broadcast %1 : vector<1x64xf32> to vector<8x64xf32>
    %35 = arith.addf %33, %34 : vector<8x64xf32>
    %cst_29 = arith.constant 0.000000e+00 : f32
    %36 = vector.broadcast %cst_29 : f32 to vector<8x64xf32>
    %37 = arith.maximumf %35, %36 : vector<8x64xf32>
    %c3 = arith.constant 3 : index
    %c0_30 = arith.constant 0 : index
    %c0_31 = arith.constant 0 : index
    %38 = vector.load %arg1[%c3, %c0_30, %c0_31] : memref<6x8x64xbf16, #tpu.memory_space<vmem>>, vector<1x8x64xbf16>
    %39 = vector.shape_cast %38 : vector<1x8x64xbf16> to vector<8x64xbf16>
    %40 = arith.extf %39 : vector<8x64xbf16> to vector<8x64xf32>
    %41 = vector.broadcast %0 : vector<1x64xf32> to vector<8x64xf32>
    %42 = arith.mulf %40, %41 : vector<8x64xf32>
    %43 = vector.broadcast %1 : vector<1x64xf32> to vector<8x64xf32>
    %44 = arith.addf %42, %43 : vector<8x64xf32>
    %cst_32 = arith.constant 0.000000e+00 : f32
    %45 = vector.broadcast %cst_32 : f32 to vector<8x64xf32>
    %46 = arith.maximumf %44, %45 : vector<8x64xf32>
    %c4 = arith.constant 4 : index
    %c0_33 = arith.constant 0 : index
    %c0_34 = arith.constant 0 : index
    %47 = vector.load %arg1[%c4, %c0_33, %c0_34] : memref<6x8x64xbf16, #tpu.memory_space<vmem>>, vector<1x8x64xbf16>
    %48 = vector.shape_cast %47 : vector<1x8x64xbf16> to vector<8x64xbf16>
    %49 = arith.extf %48 : vector<8x64xbf16> to vector<8x64xf32>
    %50 = vector.broadcast %0 : vector<1x64xf32> to vector<8x64xf32>
    %51 = arith.mulf %49, %50 : vector<8x64xf32>
    %52 = vector.broadcast %1 : vector<1x64xf32> to vector<8x64xf32>
    %53 = arith.addf %51, %52 : vector<8x64xf32>
    %cst_35 = arith.constant 0.000000e+00 : f32
    %54 = vector.broadcast %cst_35 : f32 to vector<8x64xf32>
    %55 = arith.maximumf %53, %54 : vector<8x64xf32>
    %c5 = arith.constant 5 : index
    %c0_36 = arith.constant 0 : index
    %c0_37 = arith.constant 0 : index
    %56 = vector.load %arg1[%c5, %c0_36, %c0_37] : memref<6x8x64xbf16, #tpu.memory_space<vmem>>, vector<1x8x64xbf16>
    %57 = vector.shape_cast %56 : vector<1x8x64xbf16> to vector<8x64xbf16>
    %58 = arith.extf %57 : vector<8x64xbf16> to vector<8x64xf32>
    %59 = vector.broadcast %0 : vector<1x64xf32> to vector<8x64xf32>
    %60 = arith.mulf %58, %59 : vector<8x64xf32>
    %61 = vector.broadcast %1 : vector<1x64xf32> to vector<8x64xf32>
    %62 = arith.addf %60, %61 : vector<8x64xf32>
    %cst_38 = arith.constant 0.000000e+00 : f32
    %63 = vector.broadcast %cst_38 : f32 to vector<8x64xf32>
    %64 = arith.maximumf %62, %63 : vector<8x64xf32>
    %65 = arith.truncf %19 : vector<8x64xf32> to vector<8x64xbf16>
    %cst_39 = arith.constant dense<0.000000e+00> : vector<8x8xf32>
    %66 = tpu.matmul %65, %2, %cst_39 {dimension_numbers = #tpu.dot_dimension_numbers<[1], [0], [0], [1], [0, 0, 1, 1], [], []>} : vector<8x64xbf16>, vector<64x8xbf16>, vector<8x8xf32> -> vector<8x8xf32>
    %67 = arith.truncf %28 : vector<8x64xf32> to vector<8x64xbf16>
    %cst_40 = arith.constant dense<0.000000e+00> : vector<8x8xf32>
    %68 = tpu.matmul %67, %3, %cst_40 {dimension_numbers = #tpu.dot_dimension_numbers<[1], [0], [0], [1], [0, 0, 1, 1], [], []>} : vector<8x64xbf16>, vector<64x8xbf16>, vector<8x8xf32> -> vector<8x8xf32>
    %69 = arith.addf %66, %68 : vector<8x8xf32>
    %70 = vector.broadcast %4 : vector<1x8xf32> to vector<8x8xf32>
    %71 = arith.addf %69, %70 : vector<8x8xf32>
    %cst_41 = arith.constant 0.000000e+00 : f32
    %72 = vector.broadcast %cst_41 : f32 to vector<8x8xf32>
    %73 = arith.maximumf %71, %72 : vector<8x8xf32>
    %74 = arith.truncf %28 : vector<8x64xf32> to vector<8x64xbf16>
    %cst_42 = arith.constant dense<0.000000e+00> : vector<8x8xf32>
    %75 = tpu.matmul %74, %2, %cst_42 {dimension_numbers = #tpu.dot_dimension_numbers<[1], [0], [0], [1], [0, 0, 1, 1], [], []>} : vector<8x64xbf16>, vector<64x8xbf16>, vector<8x8xf32> -> vector<8x8xf32>
    %76 = arith.truncf %37 : vector<8x64xf32> to vector<8x64xbf16>
    %cst_43 = arith.constant dense<0.000000e+00> : vector<8x8xf32>
    %77 = tpu.matmul %76, %3, %cst_43 {dimension_numbers = #tpu.dot_dimension_numbers<[1], [0], [0], [1], [0, 0, 1, 1], [], []>} : vector<8x64xbf16>, vector<64x8xbf16>, vector<8x8xf32> -> vector<8x8xf32>
    %78 = arith.addf %75, %77 : vector<8x8xf32>
    %79 = vector.broadcast %4 : vector<1x8xf32> to vector<8x8xf32>
    %80 = arith.addf %78, %79 : vector<8x8xf32>
    %cst_44 = arith.constant 0.000000e+00 : f32
    %81 = vector.broadcast %cst_44 : f32 to vector<8x8xf32>
    %82 = arith.maximumf %80, %81 : vector<8x8xf32>
    %83 = arith.truncf %46 : vector<8x64xf32> to vector<8x64xbf16>
    %cst_45 = arith.constant dense<0.000000e+00> : vector<8x8xf32>
    %84 = tpu.matmul %83, %2, %cst_45 {dimension_numbers = #tpu.dot_dimension_numbers<[1], [0], [0], [1], [0, 0, 1, 1], [], []>} : vector<8x64xbf16>, vector<64x8xbf16>, vector<8x8xf32> -> vector<8x8xf32>
    %85 = arith.truncf %55 : vector<8x64xf32> to vector<8x64xbf16>
    %cst_46 = arith.constant dense<0.000000e+00> : vector<8x8xf32>
    %86 = tpu.matmul %85, %3, %cst_46 {dimension_numbers = #tpu.dot_dimension_numbers<[1], [0], [0], [1], [0, 0, 1, 1], [], []>} : vector<8x64xbf16>, vector<64x8xbf16>, vector<8x8xf32> -> vector<8x8xf32>
    %87 = arith.addf %84, %86 : vector<8x8xf32>
    %88 = vector.broadcast %4 : vector<1x8xf32> to vector<8x8xf32>
    %89 = arith.addf %87, %88 : vector<8x8xf32>
    %cst_47 = arith.constant 0.000000e+00 : f32
    %90 = vector.broadcast %cst_47 : f32 to vector<8x8xf32>
    %91 = arith.maximumf %89, %90 : vector<8x8xf32>
    %92 = arith.truncf %55 : vector<8x64xf32> to vector<8x64xbf16>
    %cst_48 = arith.constant dense<0.000000e+00> : vector<8x8xf32>
    %93 = tpu.matmul %92, %2, %cst_48 {dimension_numbers = #tpu.dot_dimension_numbers<[1], [0], [0], [1], [0, 0, 1, 1], [], []>} : vector<8x64xbf16>, vector<64x8xbf16>, vector<8x8xf32> -> vector<8x8xf32>
    %94 = arith.truncf %64 : vector<8x64xf32> to vector<8x64xbf16>
    %cst_49 = arith.constant dense<0.000000e+00> : vector<8x8xf32>
    %95 = tpu.matmul %94, %3, %cst_49 {dimension_numbers = #tpu.dot_dimension_numbers<[1], [0], [0], [1], [0, 0, 1, 1], [], []>} : vector<8x64xbf16>, vector<64x8xbf16>, vector<8x8xf32> -> vector<8x8xf32>
    %96 = arith.addf %93, %95 : vector<8x8xf32>
    %97 = vector.broadcast %4 : vector<1x8xf32> to vector<8x8xf32>
    %98 = arith.addf %96, %97 : vector<8x8xf32>
    %cst_50 = arith.constant 0.000000e+00 : f32
    %99 = vector.broadcast %cst_50 : f32 to vector<8x8xf32>
    %100 = arith.maximumf %98, %99 : vector<8x8xf32>
    %101 = arith.maximumf %73, %82 : vector<8x8xf32>
    %102 = arith.maximumf %91, %100 : vector<8x8xf32>
    %103 = arith.maximumf %101, %102 : vector<8x8xf32>
    %cst_51 = arith.constant 0.000000e+00 : f32
    %104 = vector.broadcast %cst_51 : f32 to vector<8x8xf32>
    %105 = arith.cmpf oge, %73, %103 : vector<8x8xf32>
    %106 = arith.select %105, %103, %104 : vector<8x8xi1>, vector<8x8xf32>
    %107 = arith.cmpf oge, %82, %103 : vector<8x8xf32>
    %108 = arith.cmpf olt, %73, %103 : vector<8x8xf32>
    %109 = arith.andi %107, %108 : vector<8x8xi1>
    %110 = arith.select %109, %103, %104 : vector<8x8xi1>, vector<8x8xf32>
    %111 = arith.cmpf oge, %91, %103 : vector<8x8xf32>
    %112 = arith.cmpf olt, %73, %103 : vector<8x8xf32>
    %113 = arith.andi %111, %112 : vector<8x8xi1>
    %114 = arith.cmpf olt, %82, %103 : vector<8x8xf32>
    %115 = arith.andi %113, %114 : vector<8x8xi1>
    %116 = arith.select %115, %103, %104 : vector<8x8xi1>, vector<8x8xf32>
    %117 = arith.cmpf oge, %100, %103 : vector<8x8xf32>
    %118 = arith.cmpf olt, %73, %103 : vector<8x8xf32>
    %119 = arith.andi %117, %118 : vector<8x8xi1>
    %120 = arith.cmpf olt, %82, %103 : vector<8x8xf32>
    %121 = arith.andi %119, %120 : vector<8x8xi1>
    %122 = arith.cmpf olt, %91, %103 : vector<8x8xf32>
    %123 = arith.andi %121, %122 : vector<8x8xi1>
    %124 = arith.select %123, %103, %104 : vector<8x8xi1>, vector<8x8xf32>
    %125 = arith.truncf %106 : vector<8x8xf32> to vector<8x8xbf16>
    %cst_52 = arith.constant dense<0.000000e+00> : vector<8x64xf32>
    %126 = tpu.matmul %125, %5, %cst_52 {dimension_numbers = #tpu.dot_dimension_numbers<[1], [0], [0], [1], [0, 0, 1, 1], [], []>} : vector<8x8xbf16>, vector<8x64xbf16>, vector<8x64xf32> -> vector<8x64xf32>
    %127 = vector.broadcast %7 : vector<1x64xf32> to vector<8x64xf32>
    %128 = arith.addf %126, %127 : vector<8x64xf32>
    %129 = arith.truncf %110 : vector<8x8xf32> to vector<8x8xbf16>
    %cst_53 = arith.constant dense<0.000000e+00> : vector<8x64xf32>
    %130 = tpu.matmul %129, %5, %cst_53 {dimension_numbers = #tpu.dot_dimension_numbers<[1], [0], [0], [1], [0, 0, 1, 1], [], []>} : vector<8x8xbf16>, vector<8x64xbf16>, vector<8x64xf32> -> vector<8x64xf32>
    %131 = arith.truncf %106 : vector<8x8xf32> to vector<8x8xbf16>
    %cst_54 = arith.constant dense<0.000000e+00> : vector<8x64xf32>
    %132 = tpu.matmul %131, %6, %cst_54 {dimension_numbers = #tpu.dot_dimension_numbers<[1], [0], [0], [1], [0, 0, 1, 1], [], []>} : vector<8x8xbf16>, vector<8x64xbf16>, vector<8x64xf32> -> vector<8x64xf32>
    %133 = arith.addf %130, %132 : vector<8x64xf32>
    %134 = vector.broadcast %7 : vector<1x64xf32> to vector<8x64xf32>
    %135 = arith.addf %133, %134 : vector<8x64xf32>
    %136 = arith.truncf %110 : vector<8x8xf32> to vector<8x8xbf16>
    %cst_55 = arith.constant dense<0.000000e+00> : vector<8x64xf32>
    %137 = tpu.matmul %136, %6, %cst_55 {dimension_numbers = #tpu.dot_dimension_numbers<[1], [0], [0], [1], [0, 0, 1, 1], [], []>} : vector<8x8xbf16>, vector<8x64xbf16>, vector<8x64xf32> -> vector<8x64xf32>
    %138 = vector.broadcast %7 : vector<1x64xf32> to vector<8x64xf32>
    %139 = arith.addf %137, %138 : vector<8x64xf32>
    %140 = arith.truncf %116 : vector<8x8xf32> to vector<8x8xbf16>
    %cst_56 = arith.constant dense<0.000000e+00> : vector<8x64xf32>
    %141 = tpu.matmul %140, %5, %cst_56 {dimension_numbers = #tpu.dot_dimension_numbers<[1], [0], [0], [1], [0, 0, 1, 1], [], []>} : vector<8x8xbf16>, vector<8x64xbf16>, vector<8x64xf32> -> vector<8x64xf32>
    %142 = vector.broadcast %7 : vector<1x64xf32> to vector<8x64xf32>
    %143 = arith.addf %141, %142 : vector<8x64xf32>
    %144 = arith.truncf %124 : vector<8x8xf32> to vector<8x8xbf16>
    %cst_57 = arith.constant dense<0.000000e+00> : vector<8x64xf32>
    %145 = tpu.matmul %144, %5, %cst_57 {dimension_numbers = #tpu.dot_dimension_numbers<[1], [0], [0], [1], [0, 0, 1, 1], [], []>} : vector<8x8xbf16>, vector<8x64xbf16>, vector<8x64xf32> -> vector<8x64xf32>
    %146 = arith.truncf %116 : vector<8x8xf32> to vector<8x8xbf16>
    %cst_58 = arith.constant dense<0.000000e+00> : vector<8x64xf32>
    %147 = tpu.matmul %146, %6, %cst_58 {dimension_numbers = #tpu.dot_dimension_numbers<[1], [0], [0], [1], [0, 0, 1, 1], [], []>} : vector<8x8xbf16>, vector<8x64xbf16>, vector<8x64xf32> -> vector<8x64xf32>
    %148 = arith.addf %145, %147 : vector<8x64xf32>
    %149 = vector.broadcast %7 : vector<1x64xf32> to vector<8x64xf32>
    %150 = arith.addf %148, %149 : vector<8x64xf32>
    %151 = arith.truncf %124 : vector<8x8xf32> to vector<8x8xbf16>
    %cst_59 = arith.constant dense<0.000000e+00> : vector<8x64xf32>
    %152 = tpu.matmul %151, %6, %cst_59 {dimension_numbers = #tpu.dot_dimension_numbers<[1], [0], [0], [1], [0, 0, 1, 1], [], []>} : vector<8x8xbf16>, vector<8x64xbf16>, vector<8x64xf32> -> vector<8x64xf32>
    %153 = vector.broadcast %7 : vector<1x64xf32> to vector<8x64xf32>
    %154 = arith.addf %152, %153 : vector<8x64xf32>
    %155 = arith.truncf %128 : vector<8x64xf32> to vector<8x64xbf16>
    %cst_60 = arith.constant dense<0.000000e+00> : vector<8x128xf32>
    %156 = tpu.matmul %155, %8, %cst_60 {dimension_numbers = #tpu.dot_dimension_numbers<[1], [0], [0], [1], [0, 0, 1, 1], [], []>} : vector<8x64xbf16>, vector<64x128xbf16>, vector<8x128xf32> -> vector<8x128xf32>
    %157 = vector.broadcast %10 : vector<1x128xf32> to vector<8x128xf32>
    %158 = arith.addf %156, %157 : vector<8x128xf32>
    %159 = arith.truncf %158 : vector<8x128xf32> to vector<8x128xbf16>
    %c0_61 = arith.constant 0 : index
    %c0_62 = arith.constant 0 : index
    %c0_63 = arith.constant 0 : index
    %c0_64 = arith.constant 0 : index
    %160 = vector.load %arg13[%c0_61, %c0_62, %c0_63, %c0_64] : memref<4x2x8x128xbf16, #tpu.memory_space<vmem>>, vector<1x1x8x128xbf16>
    %161 = vector.shape_cast %160 : vector<1x1x8x128xbf16> to vector<8x128xbf16>
    %162 = vector.shape_cast %159 : vector<8x128xbf16> to vector<1x1x8x128xbf16>
    tpu.vector_store %arg13[%c0_61, %c0_62, %c0_63, %c0_64], %162 {strides = array<i32>} : memref<4x2x8x128xbf16, #tpu.memory_space<vmem>>, vector<1x1x8x128xbf16>,
    %163 = arith.truncf %135 : vector<8x64xf32> to vector<8x64xbf16>
    %cst_65 = arith.constant dense<0.000000e+00> : vector<8x128xf32>
    %164 = tpu.matmul %163, %8, %cst_65 {dimension_numbers = #tpu.dot_dimension_numbers<[1], [0], [0], [1], [0, 0, 1, 1], [], []>} : vector<8x64xbf16>, vector<64x128xbf16>, vector<8x128xf32> -> vector<8x128xf32>
    %165 = arith.truncf %128 : vector<8x64xf32> to vector<8x64xbf16>
    %cst_66 = arith.constant dense<0.000000e+00> : vector<8x128xf32>
    %166 = tpu.matmul %165, %9, %cst_66 {dimension_numbers = #tpu.dot_dimension_numbers<[1], [0], [0], [1], [0, 0, 1, 1], [], []>} : vector<8x64xbf16>, vector<64x128xbf16>, vector<8x128xf32> -> vector<8x128xf32>
    %167 = arith.addf %164, %166 : vector<8x128xf32>
    %168 = vector.broadcast %10 : vector<1x128xf32> to vector<8x128xf32>
    %169 = arith.addf %167, %168 : vector<8x128xf32>
    %170 = arith.truncf %169 : vector<8x128xf32> to vector<8x128xbf16>
    %c1_67 = arith.constant 1 : index
    %c0_68 = arith.constant 0 : index
    %c0_69 = arith.constant 0 : index
    %c0_70 = arith.constant 0 : index
    %171 = vector.load %arg13[%c1_67, %c0_68, %c0_69, %c0_70] : memref<4x2x8x128xbf16, #tpu.memory_space<vmem>>, vector<1x1x8x128xbf16>
    %172 = vector.shape_cast %171 : vector<1x1x8x128xbf16> to vector<8x128xbf16>
    %173 = vector.shape_cast %170 : vector<8x128xbf16> to vector<1x1x8x128xbf16>
    tpu.vector_store %arg13[%c1_67, %c0_68, %c0_69, %c0_70], %173 {strides = array<i32>} : memref<4x2x8x128xbf16, #tpu.memory_space<vmem>>, vector<1x1x8x128xbf16>,
    %174 = arith.truncf %139 : vector<8x64xf32> to vector<8x64xbf16>
    %cst_71 = arith.constant dense<0.000000e+00> : vector<8x128xf32>
    %175 = tpu.matmul %174, %8, %cst_71 {dimension_numbers = #tpu.dot_dimension_numbers<[1], [0], [0], [1], [0, 0, 1, 1], [], []>} : vector<8x64xbf16>, vector<64x128xbf16>, vector<8x128xf32> -> vector<8x128xf32>
    %176 = arith.truncf %135 : vector<8x64xf32> to vector<8x64xbf16>
    %cst_72 = arith.constant dense<0.000000e+00> : vector<8x128xf32>
    %177 = tpu.matmul %176, %9, %cst_72 {dimension_numbers = #tpu.dot_dimension_numbers<[1], [0], [0], [1], [0, 0, 1, 1], [], []>} : vector<8x64xbf16>, vector<64x128xbf16>, vector<8x128xf32> -> vector<8x128xf32>
    %178 = arith.addf %175, %177 : vector<8x128xf32>
    %179 = vector.broadcast %10 : vector<1x128xf32> to vector<8x128xf32>
    %180 = arith.addf %178, %179 : vector<8x128xf32>
    %181 = arith.truncf %180 : vector<8x128xf32> to vector<8x128xbf16>
    %c2_73 = arith.constant 2 : index
    %c0_74 = arith.constant 0 : index
    %c0_75 = arith.constant 0 : index
    %c0_76 = arith.constant 0 : index
    %182 = vector.load %arg13[%c2_73, %c0_74, %c0_75, %c0_76] : memref<4x2x8x128xbf16, #tpu.memory_space<vmem>>, vector<1x1x8x128xbf16>
    %183 = vector.shape_cast %182 : vector<1x1x8x128xbf16> to vector<8x128xbf16>
    %184 = vector.shape_cast %181 : vector<8x128xbf16> to vector<1x1x8x128xbf16>
    tpu.vector_store %arg13[%c2_73, %c0_74, %c0_75, %c0_76], %184 {strides = array<i32>} : memref<4x2x8x128xbf16, #tpu.memory_space<vmem>>, vector<1x1x8x128xbf16>,
    %185 = arith.truncf %139 : vector<8x64xf32> to vector<8x64xbf16>
    %cst_77 = arith.constant dense<0.000000e+00> : vector<8x128xf32>
    %186 = tpu.matmul %185, %9, %cst_77 {dimension_numbers = #tpu.dot_dimension_numbers<[1], [0], [0], [1], [0, 0, 1, 1], [], []>} : vector<8x64xbf16>, vector<64x128xbf16>, vector<8x128xf32> -> vector<8x128xf32>
    %187 = vector.broadcast %10 : vector<1x128xf32> to vector<8x128xf32>
    %188 = arith.addf %186, %187 : vector<8x128xf32>
    %189 = arith.truncf %188 : vector<8x128xf32> to vector<8x128xbf16>
    %c3_78 = arith.constant 3 : index
    %c0_79 = arith.constant 0 : index
    %c0_80 = arith.constant 0 : index
    %c0_81 = arith.constant 0 : index
    %190 = vector.load %arg13[%c3_78, %c0_79, %c0_80, %c0_81] : memref<4x2x8x128xbf16, #tpu.memory_space<vmem>>, vector<1x1x8x128xbf16>
    %191 = vector.shape_cast %190 : vector<1x1x8x128xbf16> to vector<8x128xbf16>
    %192 = vector.shape_cast %189 : vector<8x128xbf16> to vector<1x1x8x128xbf16>
    tpu.vector_store %arg13[%c3_78, %c0_79, %c0_80, %c0_81], %192 {strides = array<i32>} : memref<4x2x8x128xbf16, #tpu.memory_space<vmem>>, vector<1x1x8x128xbf16>,
    %193 = arith.truncf %143 : vector<8x64xf32> to vector<8x64xbf16>
    %cst_82 = arith.constant dense<0.000000e+00> : vector<8x128xf32>
    %194 = tpu.matmul %193, %8, %cst_82 {dimension_numbers = #tpu.dot_dimension_numbers<[1], [0], [0], [1], [0, 0, 1, 1], [], []>} : vector<8x64xbf16>, vector<64x128xbf16>, vector<8x128xf32> -> vector<8x128xf32>
    %195 = vector.broadcast %10 : vector<1x128xf32> to vector<8x128xf32>
    %196 = arith.addf %194, %195 : vector<8x128xf32>
    %197 = arith.truncf %196 : vector<8x128xf32> to vector<8x128xbf16>
    %c0_83 = arith.constant 0 : index
    %c1_84 = arith.constant 1 : index
    %c0_85 = arith.constant 0 : index
    %c0_86 = arith.constant 0 : index
    %198 = vector.load %arg13[%c0_83, %c1_84, %c0_85, %c0_86] : memref<4x2x8x128xbf16, #tpu.memory_space<vmem>>, vector<1x1x8x128xbf16>
    %199 = vector.shape_cast %198 : vector<1x1x8x128xbf16> to vector<8x128xbf16>
    %200 = vector.shape_cast %197 : vector<8x128xbf16> to vector<1x1x8x128xbf16>
    tpu.vector_store %arg13[%c0_83, %c1_84, %c0_85, %c0_86], %200 {strides = array<i32>} : memref<4x2x8x128xbf16, #tpu.memory_space<vmem>>, vector<1x1x8x128xbf16>,
    %201 = arith.truncf %150 : vector<8x64xf32> to vector<8x64xbf16>
    %cst_87 = arith.constant dense<0.000000e+00> : vector<8x128xf32>
    %202 = tpu.matmul %201, %8, %cst_87 {dimension_numbers = #tpu.dot_dimension_numbers<[1], [0], [0], [1], [0, 0, 1, 1], [], []>} : vector<8x64xbf16>, vector<64x128xbf16>, vector<8x128xf32> -> vector<8x128xf32>
    %203 = arith.truncf %143 : vector<8x64xf32> to vector<8x64xbf16>
    %cst_88 = arith.constant dense<0.000000e+00> : vector<8x128xf32>
    %204 = tpu.matmul %203, %9, %cst_88 {dimension_numbers = #tpu.dot_dimension_numbers<[1], [0], [0], [1], [0, 0, 1, 1], [], []>} : vector<8x64xbf16>, vector<64x128xbf16>, vector<8x128xf32> -> vector<8x128xf32>
    %205 = arith.addf %202, %204 : vector<8x128xf32>
    %206 = vector.broadcast %10 : vector<1x128xf32> to vector<8x128xf32>
    %207 = arith.addf %205, %206 : vector<8x128xf32>
    %208 = arith.truncf %207 : vector<8x128xf32> to vector<8x128xbf16>
    %c1_89 = arith.constant 1 : index
    %c1_90 = arith.constant 1 : index
    %c0_91 = arith.constant 0 : index
    %c0_92 = arith.constant 0 : index
    %209 = vector.load %arg13[%c1_89, %c1_90, %c0_91, %c0_92] : memref<4x2x8x128xbf16, #tpu.memory_space<vmem>>, vector<1x1x8x128xbf16>
    %210 = vector.shape_cast %209 : vector<1x1x8x128xbf16> to vector<8x128xbf16>
    %211 = vector.shape_cast %208 : vector<8x128xbf16> to vector<1x1x8x128xbf16>
    tpu.vector_store %arg13[%c1_89, %c1_90, %c0_91, %c0_92], %211 {strides = array<i32>} : memref<4x2x8x128xbf16, #tpu.memory_space<vmem>>, vector<1x1x8x128xbf16>,
    %212 = arith.truncf %154 : vector<8x64xf32> to vector<8x64xbf16>
    %cst_93 = arith.constant dense<0.000000e+00> : vector<8x128xf32>
    %213 = tpu.matmul %212, %8, %cst_93 {dimension_numbers = #tpu.dot_dimension_numbers<[1], [0], [0], [1], [0, 0, 1, 1], [], []>} : vector<8x64xbf16>, vector<64x128xbf16>, vector<8x128xf32> -> vector<8x128xf32>
    %214 = arith.truncf %150 : vector<8x64xf32> to vector<8x64xbf16>
    %cst_94 = arith.constant dense<0.000000e+00> : vector<8x128xf32>
    %215 = tpu.matmul %214, %9, %cst_94 {dimension_numbers = #tpu.dot_dimension_numbers<[1], [0], [0], [1], [0, 0, 1, 1], [], []>} : vector<8x64xbf16>, vector<64x128xbf16>, vector<8x128xf32> -> vector<8x128xf32>
    %216 = arith.addf %213, %215 : vector<8x128xf32>
    %217 = vector.broadcast %10 : vector<1x128xf32> to vector<8x128xf32>
    %218 = arith.addf %216, %217 : vector<8x128xf32>
    %219 = arith.truncf %218 : vector<8x128xf32> to vector<8x128xbf16>
    %c2_95 = arith.constant 2 : index
    %c1_96 = arith.constant 1 : index
    %c0_97 = arith.constant 0 : index
    %c0_98 = arith.constant 0 : index
    %220 = vector.load %arg13[%c2_95, %c1_96, %c0_97, %c0_98] : memref<4x2x8x128xbf16, #tpu.memory_space<vmem>>, vector<1x1x8x128xbf16>
    %221 = vector.shape_cast %220 : vector<1x1x8x128xbf16> to vector<8x128xbf16>
    %222 = vector.shape_cast %219 : vector<8x128xbf16> to vector<1x1x8x128xbf16>
    tpu.vector_store %arg13[%c2_95, %c1_96, %c0_97, %c0_98], %222 {strides = array<i32>} : memref<4x2x8x128xbf16, #tpu.memory_space<vmem>>, vector<1x1x8x128xbf16>,
    %223 = arith.truncf %154 : vector<8x64xf32> to vector<8x64xbf16>
    %cst_99 = arith.constant dense<0.000000e+00> : vector<8x128xf32>
    %224 = tpu.matmul %223, %9, %cst_99 {dimension_numbers = #tpu.dot_dimension_numbers<[1], [0], [0], [1], [0, 0, 1, 1], [], []>} : vector<8x64xbf16>, vector<64x128xbf16>, vector<8x128xf32> -> vector<8x128xf32>
    %225 = vector.broadcast %10 : vector<1x128xf32> to vector<8x128xf32>
    %226 = arith.addf %224, %225 : vector<8x128xf32>
    %227 = arith.truncf %226 : vector<8x128xf32> to vector<8x128xbf16>
    %c3_100 = arith.constant 3 : index
    %c1_101 = arith.constant 1 : index
    %c0_102 = arith.constant 0 : index
    %c0_103 = arith.constant 0 : index
    %228 = vector.load %arg13[%c3_100, %c1_101, %c0_102, %c0_103] : memref<4x2x8x128xbf16, #tpu.memory_space<vmem>>, vector<1x1x8x128xbf16>
    %229 = vector.shape_cast %228 : vector<1x1x8x128xbf16> to vector<8x128xbf16>
    %230 = vector.shape_cast %227 : vector<8x128xbf16> to vector<1x1x8x128xbf16>
    tpu.vector_store %arg13[%c3_100, %c1_101, %c0_102, %c0_103], %230 {strides = array<i32>} : memref<4x2x8x128xbf16, #tpu.memory_space<vmem>>, vector<1x1x8x128xbf16>,
    return
  }
  func.func @transform_0(%arg0: i32) -> (i32, i32, i32) {
    %c0_i32 = arith.constant 0 : i32
    %c0_i32_0 = arith.constant 0 : i32
    %c0_i32_1 = arith.constant 0 : i32
    return %c0_i32, %arg0, %c0_i32_0 : i32, i32, i32
  }
  func.func @transform_1(%arg0: i32) -> (i32, i32) {
    %c0_i32 = arith.constant 0 : i32
    %c0_i32_0 = arith.constant 0 : i32
    %c0_i32_1 = arith.constant 0 : i32
    return %c0_i32, %c0_i32_0 : i32, i32
  }
  func.func @transform_2(%arg0: i32) -> (i32, i32) {
    %c0_i32 = arith.constant 0 : i32
    %c0_i32_0 = arith.constant 0 : i32
    %c0_i32_1 = arith.constant 0 : i32
    return %c0_i32, %c0_i32_0 : i32, i32
  }
  func.func @transform_3(%arg0: i32) -> (i32, i32) {
    %c0_i32 = arith.constant 0 : i32
    %c0_i32_0 = arith.constant 0 : i32
    %c0_i32_1 = arith.constant 0 : i32
    return %c0_i32, %c0_i32_0 : i32, i32
  }
  func.func @transform_4(%arg0: i32) -> (i32, i32) {
    %c0_i32 = arith.constant 0 : i32
    %c0_i32_0 = arith.constant 0 : i32
    %c0_i32_1 = arith.constant 0 : i32
    return %c0_i32, %c0_i32_0 : i32, i32
  }
  func.func @transform_5(%arg0: i32) -> (i32, i32) {
    %c0_i32 = arith.constant 0 : i32
    %c0_i32_0 = arith.constant 0 : i32
    %c0_i32_1 = arith.constant 0 : i32
    return %c0_i32, %c0_i32_0 : i32, i32
  }
  func.func @transform_6(%arg0: i32) -> (i32, i32) {
    %c0_i32 = arith.constant 0 : i32
    %c0_i32_0 = arith.constant 0 : i32
    %c0_i32_1 = arith.constant 0 : i32
    return %c0_i32, %c0_i32_0 : i32, i32
  }
  func.func @transform_7(%arg0: i32) -> (i32, i32) {
    %c0_i32 = arith.constant 0 : i32
    %c0_i32_0 = arith.constant 0 : i32
    %c0_i32_1 = arith.constant 0 : i32
    return %c0_i32, %c0_i32_0 : i32, i32
  }
  func.func @transform_8(%arg0: i32) -> (i32, i32) {
    %c0_i32 = arith.constant 0 : i32
    %c0_i32_0 = arith.constant 0 : i32
    %c0_i32_1 = arith.constant 0 : i32
    return %c0_i32, %c0_i32_0 : i32, i32
  }
  func.func @transform_9(%arg0: i32) -> (i32, i32) {
    %c0_i32 = arith.constant 0 : i32
    %c0_i32_0 = arith.constant 0 : i32
    %c0_i32_1 = arith.constant 0 : i32
    return %c0_i32, %c0_i32_0 : i32, i32
  }
  func.func @transform_10(%arg0: i32) -> (i32, i32) {
    %c0_i32 = arith.constant 0 : i32
    %c0_i32_0 = arith.constant 0 : i32
    %c0_i32_1 = arith.constant 0 : i32
    return %c0_i32, %c0_i32_0 : i32, i32
  }
  func.func @transform_11(%arg0: i32) -> (i32, i32) {
    %c0_i32 = arith.constant 0 : i32
    %c0_i32_0 = arith.constant 0 : i32
    %c0_i32_1 = arith.constant 0 : i32
    return %c0_i32, %c0_i32_0 : i32, i32
  }
  func.func @transform_12(%arg0: i32) -> (i32, i32, i32, i32) {
    %c0_i32 = arith.constant 0 : i32
    %c0_i32_0 = arith.constant 0 : i32
    %c0_i32_1 = arith.constant 0 : i32
    %c0_i32_2 = arith.constant 0 : i32
    return %c0_i32, %c0_i32_0, %arg0, %c0_i32_1 : i32, i32, i32, i32
  }
}

</mosaic_0001>

<llo_original>
// kernel: net_forward.2
$region0: #{net_forward.2}
  #allocation0 [shape = 'u32[]', space=smem, size = 0x4, offset = 0x4, fixed_abs, tag = 'smem constant byte address 0x4 - core index']
  #allocation1 [shape = 'u32[72,128]{1,0:T(1,128)}', space=vmem, size = 0x9000, scoped, tag = 'internal scratch']
  %s0 = inlined_call_operand.vmem [shape: bf16[4,2,8,128], index: 0, kind: input, shape index: {}]
  %s1 = inlined_call_operand.vmem [shape: bf16[256,64], index: 1, kind: input, shape index: {}]
  %s2 = inlined_call_operand.vmem [shape: f32[1,1,128], index: 2, kind: output, shape index: {0}]
  %s3 = inlined_call_operand.vmem [shape: bf16[6,8,64], index: 3, kind: output, shape index: {1}]
  %4 = xla_tuple %s2, %s3
  %s5 = sld [smem:[#allocation0]]
  $region26: #{net_forward.2} parent=0
    _
  %s7 = ssub.s32 1, %s5
  %s8 = scalar_select 0, %s7, %s5
  // Predicated region
  $region2: #{net_forward.2} parent=0 // pred_check
    _
  $region3: #{net_forward.2} parent=0 // pred_check_branch
    %10 = sbr.rel (0) target = $region5
  $region4: #{net_forward.2} parent=0 // pred_region
    _
  $region5: #{net_forward.2} parent=0 // pred_fallthru
    _
  // Predicated region
  $region6: #{net_forward.2} parent=0 // pred_check
    _
  $region7: #{net_forward.2} parent=0 // pred_check_branch
    %12 = sbr.rel (0) target = $region9
  $region8: #{net_forward.2} parent=0 // pred_region
    _
  $region9: #{net_forward.2} parent=0 // pred_fallthru
    _
  %v13 = vld [vmem:[%s1] sm:$0xf]
  %v14 = vld [vmem:[%s1 + $0x4] sm:$0xf]
  %v15 = vld [vmem:[%s1 + $0x8] sm:$0xf]
  %v16 = vld [vmem:[%s1 + $0xc] sm:$0xf]
  %v17 = vld [vmem:[%s1 + $0x10] sm:$0xf]
  %v18 = vld [vmem:[%s1 + $0x14] sm:$0xf]
  %v19 = vld [vmem:[%s1 + $0x18] sm:$0xf]
  %v20 = vld [vmem:[%s1 + $0x1c] sm:$0xf]
  %v21 = vld [vmem:[%s1 + $0x20] sm:$0xf]
  %v22 = vld [vmem:[%s1 + $0x24] sm:$0xf]
  %v23 = vld [vmem:[%s1 + $0x28] sm:$0xf]
  %v24 = vld [vmem:[%s1 + $0x2c] sm:$0xf]
  %v25 = vld [vmem:[%s1 + $0x30] sm:$0xf]
  %v26 = vld [vmem:[%s1 + $0x34] sm:$0xf]
  %v27 = vld [vmem:[%s1 + $0x38] sm:$0xf]
  %v28 = vld [vmem:[%s1 + $0x3c] sm:$0xf]
  %v29 = vld [vmem:[%s1 + $0x40] sm:$0xf]
  %v30 = vld [vmem:[%s1 + $0x44] sm:$0xf]
  %v31 = vld [vmem:[%s1 + $0x48] sm:$0xf]
  %v32 = vld [vmem:[%s1 + $0x4c] sm:$0xf]
  %v33 = vld [vmem:[%s1 + $0x50] sm:$0xf]
  %v34 = vld [vmem:[%s1 + $0x54] sm:$0xf]
  %v35 = vld [vmem:[%s1 + $0x58] sm:$0xf]
  %v36 = vld [vmem:[%s1 + $0x5c] sm:$0xf]
  %v37 = vld [vmem:[%s1 + $0x60] sm:$0xf]
  %v38 = vld [vmem:[%s1 + $0x64] sm:$0xf]
  %v39 = vld [vmem:[%s1 + $0x68] sm:$0xf]
  %v40 = vld [vmem:[%s1 + $0x6c] sm:$0xf]
  %v41 = vld [vmem:[%s1 + $0x70] sm:$0xf]
  %v42 = vld [vmem:[%s1 + $0x74] sm:$0xf]
  %v43 = vld [vmem:[%s1 + $0x78] sm:$0xf]
  %v44 = vld [vmem:[%s1 + $0x7c] sm:$0xf]
  %v45 = vld [vmem:[%s0] sm:$0xf]
  %s46 = scalar_lea.vmem %s0, 8
  %v47 = vld [vmem:[%s46] sm:$0xf]
  %v80 = vunpack.c.l.b16 %v13
  %v81 = vunpack.c.l.b16 %v14
  %v82 = vunpack.c.l.b16 %v15
  %v83 = vunpack.c.l.b16 %v16
  %v84 = vunpack.c.l.b16 %v17
  %v85 = vunpack.c.l.b16 %v18
  %v86 = vunpack.c.l.b16 %v19
  %v87 = vunpack.c.l.b16 %v20
  %v88 = vunpack.c.l.b16 %v21
  %v89 = vunpack.c.l.b16 %v22
  %v90 = vunpack.c.l.b16 %v23
  %v91 = vunpack.c.l.b16 %v24
  %v92 = vunpack.c.l.b16 %v25
  %v93 = vunpack.c.l.b16 %v26
  %v94 = vunpack.c.l.b16 %v27
  %v95 = vunpack.c.l.b16 %v28
  %v96 = vunpack.c.l.b16 %v29
  %v97 = vunpack.c.l.b16 %v30
  %v98 = vunpack.c.l.b16 %v31
  %v99 = vunpack.c.l.b16 %v32
  %v100 = vunpack.c.l.b16 %v33
  %v101 = vunpack.c.l.b16 %v34
  %v102 = vunpack.c.l.b16 %v35
  %v103 = vunpack.c.l.b16 %v36
  %v104 = vunpack.c.l.b16 %v37
  %v105 = vunpack.c.l.b16 %v38
  %v106 = vunpack.c.l.b16 %v39
  %v107 = vunpack.c.l.b16 %v40
  %v108 = vunpack.c.l.b16 %v41
  %v109 = vunpack.c.l.b16 %v42
  %v110 = vunpack.c.l.b16 %v43
  %v111 = vunpack.c.l.b16 %v44
  %v112 = vpack.c.b16 %v81, %v80
  %v113 = vpack.c.b16 %v83, %v82
  %v114 = vpack.c.b16 %v85, %v84
  %v115 = vpack.c.b16 %v87, %v86
  %v116 = vpack.c.b16 %v89, %v88
  %v117 = vpack.c.b16 %v91, %v90
  %v118 = vpack.c.b16 %v93, %v92
  %v119 = vpack.c.b16 %v95, %v94
  %v120 = vpack.c.b16 %v97, %v96
  %v121 = vpack.c.b16 %v99, %v98
  %v122 = vpack.c.b16 %v101, %v100
  %v123 = vpack.c.b16 %v103, %v102
  %v124 = vpack.c.b16 %v105, %v104
  %v125 = vpack.c.b16 %v107, %v106
  %v126 = vpack.c.b16 %v109, %v108
  %v127 = vpack.c.b16 %v111, %v110
  %144 = vmatpush.bf16.msra.mxu0 %v119
  %145 = vmatpush.bf16.msra.mxu0 %v118
  %146 = vmatpush.bf16.msra.mxu0 %v117
  %147 = vmatpush.bf16.msra.mxu0 %v116
  %148 = vmatpush.bf16.msra.mxu0 %v115
  %149 = vmatpush.bf16.msra.mxu0 %v114
  %150 = vmatpush.bf16.msra.mxu0 %v113
  %151 = vmatpush.bf16.msra.mxu0 %v112
  %152 = vmatmul.bf16.gmra.mxu0 %v45
  %v153 = vpop.f32.mrf.mxu0
  %v154 = vadd.f32 0.0, %v153
  %v155 = vpop.f32.mrf.mxu0
  %156 = vdwg.mxu0
  %157 = vmatpush.bf16.msra.mxu0 %v127
  %158 = vmatpush.bf16.msra.mxu0 %v126
  %159 = vmatpush.bf16.msra.mxu0 %v125
  %160 = vmatpush.bf16.msra.mxu0 %v124
  %161 = vmatpush.bf16.msra.mxu0 %v123
  %162 = vmatpush.bf16.msra.mxu0 %v122
  %163 = vmatpush.bf16.msra.mxu0 %v121
  %164 = vmatpush.bf16.msra.mxu0 %v120
  %165 = vmatmul.bf16.gmra.mxu0 %v47
  %v166 = vpop.f32.mrf.mxu0
  %v167 = vadd.f32 %v154, %v166
  %v168 = vpop.f32.mrf.mxu0
  %169 = vdwg.mxu0
  %v170 = vpack.c.bf16 %v167, %v167
  %vm171 = vcmask 519168
  %172 = vst.msk [vmem:[%s3] sm:$0xf] %vm171, %v170
  %v173 = vmul.f32 %v167, %v167
  %v174 = vld [vmem:[%s46] sm:$0xf]
  %s175 = scalar_lea.vmem %s0, 16
  %v176 = vld [vmem:[%s175] sm:$0xf]
  %177 = vmatpush.bf16.msra.mxu0 %v119
  %178 = vmatpush.bf16.msra.mxu0 %v118
  %179 = vmatpush.bf16.msra.mxu0 %v117
  %180 = vmatpush.bf16.msra.mxu0 %v116
  %181 = vmatpush.bf16.msra.mxu0 %v115
  %182 = vmatpush.bf16.msra.mxu0 %v114
  %183 = vmatpush.bf16.msra.mxu0 %v113
  %184 = vmatpush.bf16.msra.mxu0 %v112
  %185 = vmatmul.bf16.gmra.mxu0 %v174
  %v186 = vpop.f32.mrf.mxu0
  %v187 = vadd.f32 0.0, %v186
  %v188 = vpop.f32.mrf.mxu0
  %189 = vdwg.mxu0
  %190 = vmatpush.bf16.msra.mxu0 %v127
  %191 = vmatpush.bf16.msra.mxu0 %v126
  %192 = vmatpush.bf16.msra.mxu0 %v125
  %193 = vmatpush.bf16.msra.mxu0 %v124
  %194 = vmatpush.bf16.msra.mxu0 %v123
  %195 = vmatpush.bf16.msra.mxu0 %v122
  %196 = vmatpush.bf16.msra.mxu0 %v121
  %197 = vmatpush.bf16.msra.mxu0 %v120
  %198 = vmatmul.bf16.gmra.mxu0 %v176
  %v199 = vpop.f32.mrf.mxu0
  %v200 = vadd.f32 %v187, %v199
  %v201 = vpop.f32.mrf.mxu0
  %202 = vdwg.mxu0
  %v203 = vpack.c.bf16 %v200, %v200
  %s204 = scalar_lea.vmem %s3, 4
  %205 = vst.msk [vmem:[%s204] sm:$0xf] %vm171, %v203
  %v206 = vadd.f32 %v167, %v200
  %v207 = vmul.f32 %v200, %v200
  %v208 = vadd.f32 %v173, %v207
  %v209 = vld [vmem:[%s175] sm:$0xf]
  %s210 = scalar_lea.vmem %s0, 24
  %v211 = vld [vmem:[%s210] sm:$0xf]
  %212 = vmatpush.bf16.msra.mxu0 %v119
  %213 = vmatpush.bf16.msra.mxu0 %v118
  %214 = vmatpush.bf16.msra.mxu0 %v117
  %215 = vmatpush.bf16.msra.mxu0 %v116
  %216 = vmatpush.bf16.msra.mxu0 %v115
  %217 = vmatpush.bf16.msra.mxu0 %v114
  %218 = vmatpush.bf16.msra.mxu0 %v113
  %219 = vmatpush.bf16.msra.mxu0 %v112
  %220 = vmatmul.bf16.gmra.mxu0 %v209
  %v221 = vpop.f32.mrf.mxu0
  %v222 = vadd.f32 0.0, %v221
  %v223 = vpop.f32.mrf.mxu0
  %224 = vdwg.mxu0
  %225 = vmatpush.bf16.msra.mxu0 %v127
  %226 = vmatpush.bf16.msra.mxu0 %v126
  %227 = vmatpush.bf16.msra.mxu0 %v125
  %228 = vmatpush.bf16.msra.mxu0 %v124
  %229 = vmatpush.bf16.msra.mxu0 %v123
  %230 = vmatpush.bf16.msra.mxu0 %v122
  %231 = vmatpush.bf16.msra.mxu0 %v121
  %232 = vmatpush.bf16.msra.mxu0 %v120
  %233 = vmatmul.bf16.gmra.mxu0 %v211
  %v234 = vpop.f32.mrf.mxu0
  %v235 = vadd.f32 %v222, %v234
  %v236 = vpop.f32.mrf.mxu0
  %237 = vdwg.mxu0
  %v238 = vpack.c.bf16 %v235, %v235
  %s239 = scalar_lea.vmem %s3, 8
  %240 = vst.msk [vmem:[%s239] sm:$0xf] %vm171, %v238
  %v241 = vadd.f32 %v206, %v235
  %v242 = vmul.f32 %v235, %v235
  %v243 = vadd.f32 %v208, %v242
  %s244 = scalar_lea.vmem %s0, 4
  %v245 = vld [vmem:[%s244] sm:$0xf]
  %s246 = scalar_lea.vmem %s0, 12
  %v247 = vld [vmem:[%s246] sm:$0xf]
  %248 = vmatpush.bf16.msra.mxu0 %v119
  %249 = vmatpush.bf16.msra.mxu0 %v118
  %250 = vmatpush.bf16.msra.mxu0 %v117
  %251 = vmatpush.bf16.msra.mxu0 %v116
  %252 = vmatpush.bf16.msra.mxu0 %v115
  %253 = vmatpush.bf16.msra.mxu0 %v114
  %254 = vmatpush.bf16.msra.mxu0 %v113
  %255 = vmatpush.bf16.msra.mxu0 %v112
  %256 = vmatmul.bf16.gmra.mxu0 %v245
  %v257 = vpop.f32.mrf.mxu0
  %v258 = vadd.f32 0.0, %v257
  %v259 = vpop.f32.mrf.mxu0
  %260 = vdwg.mxu0
  %261 = vmatpush.bf16.msra.mxu0 %v127
  %262 = vmatpush.bf16.msra.mxu0 %v126
  %263 = vmatpush.bf16.msra.mxu0 %v125
  %264 = vmatpush.bf16.msra.mxu0 %v124
  %265 = vmatpush.bf16.msra.mxu0 %v123
  %266 = vmatpush.bf16.msra.mxu0 %v122
  %267 = vmatpush.bf16.msra.mxu0 %v121
  %268 = vmatpush.bf16.msra.mxu0 %v120
  %269 = vmatmul.bf16.gmra.mxu0 %v247
  %v270 = vpop.f32.mrf.mxu0
  %v271 = vadd.f32 %v258, %v270
  %v272 = vpop.f32.mrf.mxu0
  %273 = vdwg.mxu0
  %v274 = vpack.c.bf16 %v271, %v271
  %s275 = scalar_lea.vmem %s3, 12
  %276 = vst.msk [vmem:[%s275] sm:$0xf] %vm171, %v274
  %v277 = vadd.f32 %v241, %v271
  %v278 = vmul.f32 %v271, %v271
  %v279 = vadd.f32 %v243, %v278
  %v280 = vld [vmem:[%s246] sm:$0xf]
  %s281 = scalar_lea.vmem %s0, 20
  %v282 = vld [vmem:[%s281] sm:$0xf]
  %283 = vmatpush.bf16.msra.mxu0 %v119
  %284 = vmatpush.bf16.msra.mxu0 %v118
  %285 = vmatpush.bf16.msra.mxu0 %v117
  %286 = vmatpush.bf16.msra.mxu0 %v116
  %287 = vmatpush.bf16.msra.mxu0 %v115
  %288 = vmatpush.bf16.msra.mxu0 %v114
  %289 = vmatpush.bf16.msra.mxu0 %v113
  %290 = vmatpush.bf16.msra.mxu0 %v112
  %291 = vmatmul.bf16.gmra.mxu0 %v280
  %v292 = vpop.f32.mrf.mxu0
  %v293 = vadd.f32 0.0, %v292
  %v294 = vpop.f32.mrf.mxu0
  %295 = vdwg.mxu0
  %296 = vmatpush.bf16.msra.mxu0 %v127
  %297 = vmatpush.bf16.msra.mxu0 %v126
  %298 = vmatpush.bf16.msra.mxu0 %v125
  %299 = vmatpush.bf16.msra.mxu0 %v124
  %300 = vmatpush.bf16.msra.mxu0 %v123
  %301 = vmatpush.bf16.msra.mxu0 %v122
  %302 = vmatpush.bf16.msra.mxu0 %v121
  %303 = vmatpush.bf16.msra.mxu0 %v120
  %304 = vmatmul.bf16.gmra.mxu0 %v282
  %v305 = vpop.f32.mrf.mxu0
  %v306 = vadd.f32 %v293, %v305
  %v307 = vpop.f32.mrf.mxu0
  %308 = vdwg.mxu0
  %v309 = vpack.c.bf16 %v306, %v306
  %s310 = scalar_lea.vmem %s3, 16
  %311 = vst.msk [vmem:[%s310] sm:$0xf] %vm171, %v309
  %v312 = vadd.f32 %v277, %v306
  %v313 = vmul.f32 %v306, %v306
  %v314 = vadd.f32 %v279, %v313
  %v315 = vld [vmem:[%s281] sm:$0xf]
  %s316 = scalar_lea.vmem %s0, 28
  %v317 = vld [vmem:[%s316] sm:$0xf]
  %318 = vmatpush.bf16.msra.mxu0 %v119
  %319 = vmatpush.bf16.msra.mxu0 %v118
  %320 = vmatpush.bf16.msra.mxu0 %v117
  %321 = vmatpush.bf16.msra.mxu0 %v116
  %322 = vmatpush.bf16.msra.mxu0 %v115
  %323 = vmatpush.bf16.msra.mxu0 %v114
  %324 = vmatpush.bf16.msra.mxu0 %v113
  %325 = vmatpush.bf16.msra.mxu0 %v112
  %326 = vmatmul.bf16.gmra.mxu0 %v315
  %v327 = vpop.f32.mrf.mxu0
  %v328 = vadd.f32 0.0, %v327
  %v329 = vpop.f32.mrf.mxu0
  %330 = vdwg.mxu0
  %331 = vmatpush.bf16.msra.mxu0 %v127
  %332 = vmatpush.bf16.msra.mxu0 %v126
  %333 = vmatpush.bf16.msra.mxu0 %v125
  %334 = vmatpush.bf16.msra.mxu0 %v124
  %335 = vmatpush.bf16.msra.mxu0 %v123
  %336 = vmatpush.bf16.msra.mxu0 %v122
  %337 = vmatpush.bf16.msra.mxu0 %v121
  %338 = vmatpush.bf16.msra.mxu0 %v120
  %339 = vmatmul.bf16.gmra.mxu0 %v317
  %v340 = vpop.f32.mrf.mxu0
  %v341 = vadd.f32 %v328, %v340
  %v342 = vpop.f32.mrf.mxu0
  %343 = vdwg.mxu0
  %v344 = vpack.c.bf16 %v341, %v341
  %s345 = scalar_lea.vmem %s3, 20
  %346 = vst.msk [vmem:[%s345] sm:$0xf] %vm171, %v344
  %v347 = vadd.f32 %v312, %v341
  %v348 = vmul.f32 %v341, %v341
  %v349 = vadd.f32 %v314, %v348
  %vm350 = vcmask 523264
  %v351 = vsel %vm350, %v347, 0.0
  %v352 = vrot.slane %v351, 4
  %v353 = vadd.f32 %v351, %v352
  %v354 = vrot.slane %v353, 2
  %v355 = vadd.f32 %v353, %v354
  %v356 = vrot.slane %v355, 1
  %v357 = vadd.f32 %v355, %v356
  %v358 = vsel %vm350, %v349, 0.0
  %v359 = vrot.slane %v358, 4
  %v360 = vadd.f32 %v358, %v359
  %v361 = vrot.slane %v360, 2
  %v362 = vadd.f32 %v360, %v361
  %v363 = vrot.slane %v362, 1
  %v364 = vadd.f32 %v362, %v363
  %366 = vrot.lane.b32.xlu0 %v364, 64
  %v367 = vpop.permute.xlu0 %366
  %v369 = vsel %vm350, %v357, %v367
  %370 = vst [vmem:[%s2] sm:$0x1] %v369
  // Predicated region
  $region10: #{net_forward.2} parent=0 // pred_check
    _
  $region11: #{net_forward.2} parent=0 // pred_check_branch
    %372 = sbr.rel (0) target = $region13
  $region12: #{net_forward.2} parent=0 // pred_region
    _
  $region13: #{net_forward.2} parent=0 // pred_fallthru
    _
  // Predicated region
  $region14: #{net_forward.2} parent=0 // pred_check
    _
  $region15: #{net_forward.2} parent=0 // pred_check_branch
    %374 = sbr.rel (0) target = $region17
  $region16: #{net_forward.2} parent=0 // pred_region
    _
  $region17: #{net_forward.2} parent=0 // pred_fallthru
    _
  // Predicated region
  $region18: #{net_forward.2} parent=0 // pred_check
    _
  $region19: #{net_forward.2} parent=0 // pred_check_branch
    %376 = sbr.rel (0) target = $region21
  $region20: #{net_forward.2} parent=0 // pred_region
    _
  $region21: #{net_forward.2} parent=0 // pred_fallthru
    _
  // Predicated region
  $region22: #{net_forward.2} parent=0 // pred_check
    _
  $region23: #{net_forward.2} parent=0 // pred_check_branch
    %378 = sbr.rel (0) target = $region25
  $region24: #{net_forward.2} parent=0 // pred_region
    _
  $region25: #{net_forward.2} parent=0 // pred_fallthru
    _

// kernel: net_forward.3
$region0: #{net_forward.3}
  #allocation0 [shape = 'u32[]', space=smem, size = 0x4, offset = 0x4, fixed_abs, tag = 'smem constant byte address 0x4 - core index']
  #allocation1 [shape = 'u32[72,128]{1,0:T(1,128)}', space=vmem, size = 0x9000, scoped, tag = 'internal scratch']
  %s0 = inlined_call_operand.vmem [shape: bf16[6,8,64], index: 0, kind: input, shape index: {}]
  %s1 = inlined_call_operand.vmem [shape: f32[1,64], index: 1, kind: input, shape index: {}]
  %s2 = inlined_call_operand.vmem [shape: f32[1,64], index: 2, kind: input, shape index: {}]
  %s3 = inlined_call_operand.vmem [shape: bf16[64,8], index: 3, kind: input, shape index: {}]
  %s4 = inlined_call_operand.vmem [shape: bf16[64,8], index: 4, kind: input, shape index: {}]
  %s5 = inlined_call_operand.vmem [shape: f32[1,8], index: 5, kind: input, shape index: {}]
  %s6 = inlined_call_operand.vmem [shape: bf16[8,64], index: 6, kind: input, shape index: {}]
  %s7 = inlined_call_operand.vmem [shape: bf16[8,64], index: 7, kind: input, shape index: {}]
  %s8 = inlined_call_operand.vmem [shape: f32[1,64], index: 8, kind: input, shape index: {}]
  %s9 = inlined_call_operand.vmem [shape: bf16[64,128], index: 9, kind: input, shape index: {}]
  %s10 = inlined_call_operand.vmem [shape: bf16[64,128], index: 10, kind: input, shape index: {}]
  %s11 = inlined_call_operand.vmem [shape: f32[1,128], index: 11, kind: input, shape index: {}]
  %s12 = inlined_call_operand.vmem [shape: bf16[4,2,8,128], index: 12, kind: output, shape index: {}]
  %s13 = sld [smem:[#allocation0]]
  $region58: #{net_forward.3} parent=0
    _
  %s15 = ssub.s32 1, %s13
  %s16 = scalar_select 0, %s15, %s13
  // Predicated region
  $region2: #{net_forward.3} parent=0 // pred_check
    _
  $region3: #{net_forward.3} parent=0 // pred_check_branch
    %18 = sbr.rel (0) target = $region5
  $region4: #{net_forward.3} parent=0 // pred_region
    _
  $region5: #{net_forward.3} parent=0 // pred_fallthru
    _
  // Predicated region
  $region6: #{net_forward.3} parent=0 // pred_check
    _
  $region7: #{net_forward.3} parent=0 // pred_check_branch
    %20 = sbr.rel (0) target = $region9
  $region8: #{net_forward.3} parent=0 // pred_region
    _
  $region9: #{net_forward.3} parent=0 // pred_fallthru
    _
  // Predicated region
  $region10: #{net_forward.3} parent=0 // pred_check
    _
  $region11: #{net_forward.3} parent=0 // pred_check_branch
    %22 = sbr.rel (0) target = $region13
  $region12: #{net_forward.3} parent=0 // pred_region
    _
  $region13: #{net_forward.3} parent=0 // pred_fallthru
    _
  // Predicated region
  $region14: #{net_forward.3} parent=0 // pred_check
    _
  $region15: #{net_forward.3} parent=0 // pred_check_branch
    %24 = sbr.rel (0) target = $region17
  $region16: #{net_forward.3} parent=0 // pred_region
    _
  $region17: #{net_forward.3} parent=0 // pred_fallthru
    _
  // Predicated region
  $region18: #{net_forward.3} parent=0 // pred_check
    _
  $region19: #{net_forward.3} parent=0 // pred_check_branch
    %26 = sbr.rel (0) target = $region21
  $region20: #{net_forward.3} parent=0 // pred_region
    _
  $region21: #{net_forward.3} parent=0 // pred_fallthru
    _
  // Predicated region
  $region22: #{net_forward.3} parent=0 // pred_check
    _
  $region23: #{net_forward.3} parent=0 // pred_check_branch
    %28 = sbr.rel (0) target = $region25
  $region24: #{net_forward.3} parent=0 // pred_region
    _
  $region25: #{net_forward.3} parent=0 // pred_fallthru
    _
  // Predicated region
  $region26: #{net_forward.3} parent=0 // pred_check
    _
  $region27: #{net_forward.3} parent=0 // pred_check_branch
    %30 = sbr.rel (0) target = $region29
  $region28: #{net_forward.3} parent=0 // pred_region
    _
  $region29: #{net_forward.3} parent=0 // pred_fallthru
    _
  // Predicated region
  $region30: #{net_forward.3} parent=0 // pred_check
    _
  $region31: #{net_forward.3} parent=0 // pred_check_branch
    %32 = sbr.rel (0) target = $region33
  $region32: #{net_forward.3} parent=0 // pred_region
    _
  $region33: #{net_forward.3} parent=0 // pred_fallthru
    _
  // Predicated region
  $region34: #{net_forward.3} parent=0 // pred_check
    _
  $region35: #{net_forward.3} parent=0 // pred_check_branch
    %34 = sbr.rel (0) target = $region37
  $region36: #{net_forward.3} parent=0 // pred_region
    _
  $region37: #{net_forward.3} parent=0 // pred_fallthru
    _
  // Predicated region
  $region38: #{net_forward.3} parent=0 // pred_check
    _
  $region39: #{net_forward.3} parent=0 // pred_check_branch
    %36 = sbr.rel (0) target = $region41
  $region40: #{net_forward.3} parent=0 // pred_region
    _
  $region41: #{net_forward.3} parent=0 // pred_fallthru
    _
  // Predicated region
  $region42: #{net_forward.3} parent=0 // pred_check
    _
  $region43: #{net_forward.3} parent=0 // pred_check_branch
    %38 = sbr.rel (0) target = $region45
  $region44: #{net_forward.3} parent=0 // pred_region
    _
  $region45: #{net_forward.3} parent=0 // pred_fallthru
    _
  // Predicated region
  $region46: #{net_forward.3} parent=0 // pred_check
    _
  $region47: #{net_forward.3} parent=0 // pred_check_branch
    %40 = sbr.rel (0) target = $region49
  $region48: #{net_forward.3} parent=0 // pred_region
    _
  $region49: #{net_forward.3} parent=0 // pred_fallthru
    _
  %v42 = vld [vmem:[%s1] sm:$0x1]
  %v43 = vld [vmem:[%s2] sm:$0x1]
  %v44 = vld [vmem:[%s3] sm:$0xf]
  %v45 = vld [vmem:[%s3 + $0x4] sm:$0xf]
  %v46 = vld [vmem:[%s3 + $0x8] sm:$0xf]
  %v47 = vld [vmem:[%s3 + $0xc] sm:$0xf]
  %v48 = vld [vmem:[%s3 + $0x10] sm:$0xf]
  %v49 = vld [vmem:[%s3 + $0x14] sm:$0xf]
  %v50 = vld [vmem:[%s3 + $0x18] sm:$0xf]
  %v51 = vld [vmem:[%s3 + $0x1c] sm:$0xf]
  %v52 = vld [vmem:[%s4] sm:$0xf]
  %v53 = vld [vmem:[%s4 + $0x4] sm:$0xf]
  %v54 = vld [vmem:[%s4 + $0x8] sm:$0xf]
  %v55 = vld [vmem:[%s4 + $0xc] sm:$0xf]
  %v56 = vld [vmem:[%s4 + $0x10] sm:$0xf]
  %v57 = vld [vmem:[%s4 + $0x14] sm:$0xf]
  %v58 = vld [vmem:[%s4 + $0x18] sm:$0xf]
  %v59 = vld [vmem:[%s4 + $0x1c] sm:$0xf]
  %v60 = vld [vmem:[%s5] sm:$0x1]
  %v61 = vld [vmem:[%s6] sm:$0xf]
  %v62 = vld [vmem:[%s7] sm:$0xf]
  %v63 = vld [vmem:[%s8] sm:$0x1]
  %v64 = vld [vmem:[%s9] sm:$0xf]
  %v65 = vld [vmem:[%s9 + $0x4] sm:$0xf]
  %v66 = vld [vmem:[%s9 + $0x8] sm:$0xf]
  %v67 = vld [vmem:[%s9 + $0xc] sm:$0xf]
  %v68 = vld [vmem:[%s9 + $0x10] sm:$0xf]
  %v69 = vld [vmem:[%s9 + $0x14] sm:$0xf]
  %v70 = vld [vmem:[%s9 + $0x18] sm:$0xf]
  %v71 = vld [vmem:[%s9 + $0x1c] sm:$0xf]
  %v72 = vld [vmem:[%s10] sm:$0xf]
  %v73 = vld [vmem:[%s10 + $0x4] sm:$0xf]
  %v74 = vld [vmem:[%s10 + $0x8] sm:$0xf]
  %v75 = vld [vmem:[%s10 + $0xc] sm:$0xf]
  %v76 = vld [vmem:[%s10 + $0x10] sm:$0xf]
  %v77 = vld [vmem:[%s10 + $0x14] sm:$0xf]
  %v78 = vld [vmem:[%s10 + $0x18] sm:$0xf]
  %v79 = vld [vmem:[%s10 + $0x1c] sm:$0xf]
  %v80 = vld [vmem:[%s11] sm:$0x1]
  %v81 = vld [vmem:[%s0] sm:$0xf]
  %v82 = vunpack.c.l.bf16 %v81
  %v84 = vperm.slane %v42, 0
  %v86 = vmul.f32 %v82, %v84
  %v88 = vperm.slane %v43, 0
  %v90 = vadd.f32 %v86, %v88
  %v91 = vmax.f32 %v90, 0.0
  %s92 = scalar_lea.vmem %s0, 4
  %v93 = vld [vmem:[%s92] sm:$0xf]
  %v94 = vunpack.c.l.bf16 %v93
  %v95 = vmul.f32 %v94, %v84
  %v96 = vadd.f32 %v95, %v88
  %v97 = vmax.f32 %v96, 0.0
  %s98 = scalar_lea.vmem %s0, 8
  %v99 = vld [vmem:[%s98] sm:$0xf]
  %v100 = vunpack.c.l.bf16 %v99
  %v101 = vmul.f32 %v100, %v84
  %v102 = vadd.f32 %v101, %v88
  %v103 = vmax.f32 %v102, 0.0
  %s104 = scalar_lea.vmem %s0, 12
  %v105 = vld [vmem:[%s104] sm:$0xf]
  %v106 = vunpack.c.l.bf16 %v105
  %v107 = vmul.f32 %v106, %v84
  %v108 = vadd.f32 %v107, %v88
  %v109 = vmax.f32 %v108, 0.0
  %s110 = scalar_lea.vmem %s0, 16
  %v111 = vld [vmem:[%s110] sm:$0xf]
  %v112 = vunpack.c.l.bf16 %v111
  %v113 = vmul.f32 %v112, %v84
  %v114 = vadd.f32 %v113, %v88
  %v115 = vmax.f32 %v114, 0.0
  %s116 = scalar_lea.vmem %s0, 20
  %v117 = vld [vmem:[%s116] sm:$0xf]
  %v118 = vunpack.c.l.bf16 %v117
  %v119 = vmul.f32 %v118, %v84
  %v120 = vadd.f32 %v119, %v88
  %v121 = vmax.f32 %v120, 0.0
  %v122 = vpack.c.bf16 %v91, %v91
  %v123 = vpack.c.bf16 %v97, %v97
  %v132 = vunpack.c.l.b16 %v52
  %v133 = vunpack.c.l.b16 %v53
  %v134 = vunpack.c.l.b16 %v54
  %v135 = vunpack.c.l.b16 %v55
  %v136 = vunpack.c.l.b16 %v56
  %v137 = vunpack.c.l.b16 %v57
  %v138 = vunpack.c.l.b16 %v58
  %v139 = vunpack.c.l.b16 %v59
  %v140 = vpack.c.b16 %v133, %v132
  %v141 = vpack.c.b16 %v135, %v134
  %v142 = vpack.c.b16 %v137, %v136
  %v143 = vpack.c.b16 %v139, %v138
  %vm148 = vcmask 523264
  %v150 = vsel %vm148, %v123, 0
  %152 = vmatpush.bf16.msra.mxu0 0
  %153 = vmatpush.bf16.msra.mxu0 0
  %154 = vmatpush.bf16.msra.mxu0 0
  %155 = vmatpush.bf16.msra.mxu0 0
  %156 = vmatpush.bf16.msra.mxu0 %v143
  %157 = vmatpush.bf16.msra.mxu0 %v142
  %158 = vmatpush.bf16.msra.mxu0 %v141
  %159 = vmatpush.bf16.msra.mxu0 %v140
  %160 = vmatmul.bf16.gmra.mxu0 %v150
  %v161 = vpop.f32.mrf.mxu0
  %v162 = vadd.f32 0.0, %v161
  %v163 = vpop.f32.mrf.mxu0
  %164 = vdwg.mxu0
  %v173 = vunpack.c.l.b16 %v44
  %v174 = vunpack.c.l.b16 %v45
  %v175 = vunpack.c.l.b16 %v46
  %v176 = vunpack.c.l.b16 %v47
  %v177 = vunpack.c.l.b16 %v48
  %v178 = vunpack.c.l.b16 %v49
  %v179 = vunpack.c.l.b16 %v50
  %v180 = vunpack.c.l.b16 %v51
  %v181 = vpack.c.b16 %v174, %v173
  %v182 = vpack.c.b16 %v176, %v175
  %v183 = vpack.c.b16 %v178, %v177
  %v184 = vpack.c.b16 %v180, %v179
  %v190 = vsel %vm148, %v122, 0
  %192 = vmatpush.bf16.msra.mxu0 0
  %193 = vmatpush.bf16.msra.mxu0 0
  %194 = vmatpush.bf16.msra.mxu0 0
  %195 = vmatpush.bf16.msra.mxu0 0
  %196 = vmatpush.bf16.msra.mxu0 %v184
  %197 = vmatpush.bf16.msra.mxu0 %v183
  %198 = vmatpush.bf16.msra.mxu0 %v182
  %199 = vmatpush.bf16.msra.mxu0 %v181
  %200 = vmatmul.bf16.gmra.mxu0 %v190
  %v201 = vpop.f32.mrf.mxu0
  %v202 = vadd.f32 %v162, %v201
  %v203 = vpop.f32.mrf.mxu0
  %204 = vdwg.mxu0
  %v206 = vperm.slane %v60, 0
  %v208 = vadd.f32 %v202, %v206
  %v209 = vmax.f32 %v208, 0.0
  %v210 = vpack.c.bf16 %v103, %v103
  %v212 = vsel %vm148, %v210, 0
  %214 = vmatpush.bf16.msra.mxu0 0
  %215 = vmatpush.bf16.msra.mxu0 0
  %216 = vmatpush.bf16.msra.mxu0 0
  %217 = vmatpush.bf16.msra.mxu0 0
  %218 = vmatpush.bf16.msra.mxu0 %v143
  %219 = vmatpush.bf16.msra.mxu0 %v142
  %220 = vmatpush.bf16.msra.mxu0 %v141
  %221 = vmatpush.bf16.msra.mxu0 %v140
  %222 = vmatmul.bf16.gmra.mxu0 %v212
  %v223 = vpop.f32.mrf.mxu0
  %v224 = vadd.f32 0.0, %v223
  %v225 = vpop.f32.mrf.mxu0
  %226 = vdwg.mxu0
  %227 = vmatpush.bf16.msra.mxu0 0
  %228 = vmatpush.bf16.msra.mxu0 0
  %229 = vmatpush.bf16.msra.mxu0 0
  %230 = vmatpush.bf16.msra.mxu0 0
  %231 = vmatpush.bf16.msra.mxu0 %v184
  %232 = vmatpush.bf16.msra.mxu0 %v183
  %233 = vmatpush.bf16.msra.mxu0 %v182
  %234 = vmatpush.bf16.msra.mxu0 %v181
  %235 = vmatmul.bf16.gmra.mxu0 %v150
  %v236 = vpop.f32.mrf.mxu0
  %v237 = vadd.f32 %v224, %v236
  %v238 = vpop.f32.mrf.mxu0
  %239 = vdwg.mxu0
  %v240 = vadd.f32 %v237, %v206
  %v241 = vmax.f32 %v240, 0.0
  %v242 = vpack.c.bf16 %v109, %v109
  %v243 = vpack.c.bf16 %v115, %v115
  %v245 = vsel %vm148, %v243, 0
  %247 = vmatpush.bf16.msra.mxu0 0
  %248 = vmatpush.bf16.msra.mxu0 0
  %249 = vmatpush.bf16.msra.mxu0 0
  %250 = vmatpush.bf16.msra.mxu0 0
  %251 = vmatpush.bf16.msra.mxu0 %v143
  %252 = vmatpush.bf16.msra.mxu0 %v142
  %253 = vmatpush.bf16.msra.mxu0 %v141
  %254 = vmatpush.bf16.msra.mxu0 %v140
  %255 = vmatmul.bf16.gmra.mxu0 %v245
  %v256 = vpop.f32.mrf.mxu0
  %v257 = vadd.f32 0.0, %v256
  %v258 = vpop.f32.mrf.mxu0
  %259 = vdwg.mxu0
  %v261 = vsel %vm148, %v242, 0
  %263 = vmatpush.bf16.msra.mxu0 0
  %264 = vmatpush.bf16.msra.mxu0 0
  %265 = vmatpush.bf16.msra.mxu0 0
  %266 = vmatpush.bf16.msra.mxu0 0
  %267 = vmatpush.bf16.msra.mxu0 %v184
  %268 = vmatpush.bf16.msra.mxu0 %v183
  %269 = vmatpush.bf16.msra.mxu0 %v182
  %270 = vmatpush.bf16.msra.mxu0 %v181
  %271 = vmatmul.bf16.gmra.mxu0 %v261
  %v272 = vpop.f32.mrf.mxu0
  %v273 = vadd.f32 %v257, %v272
  %v274 = vpop.f32.mrf.mxu0
  %275 = vdwg.mxu0
  %v276 = vadd.f32 %v273, %v206
  %v277 = vmax.f32 %v276, 0.0
  %v278 = vpack.c.bf16 %v121, %v121
  %v280 = vsel %vm148, %v278, 0
  %282 = vmatpush.bf16.msra.mxu0 0
  %283 = vmatpush.bf16.msra.mxu0 0
  %284 = vmatpush.bf16.msra.mxu0 0
  %285 = vmatpush.bf16.msra.mxu0 0
  %286 = vmatpush.bf16.msra.mxu0 %v143
  %287 = vmatpush.bf16.msra.mxu0 %v142
  %288 = vmatpush.bf16.msra.mxu0 %v141
  %289 = vmatpush.bf16.msra.mxu0 %v140
  %290 = vmatmul.bf16.gmra.mxu0 %v280
  %v291 = vpop.f32.mrf.mxu0
  %v292 = vadd.f32 0.0, %v291
  %v293 = vpop.f32.mrf.mxu0
  %294 = vdwg.mxu0
  %295 = vmatpush.bf16.msra.mxu0 0
  %296 = vmatpush.bf16.msra.mxu0 0
  %297 = vmatpush.bf16.msra.mxu0 0
  %298 = vmatpush.bf16.msra.mxu0 0
  %299 = vmatpush.bf16.msra.mxu0 %v184
  %300 = vmatpush.bf16.msra.mxu0 %v183
  %301 = vmatpush.bf16.msra.mxu0 %v182
  %302 = vmatpush.bf16.msra.mxu0 %v181
  %303 = vmatmul.bf16.gmra.mxu0 %v245
  %v304 = vpop.f32.mrf.mxu0
  %v305 = vadd.f32 %v292, %v304
  %v306 = vpop.f32.mrf.mxu0
  %307 = vdwg.mxu0
  %v308 = vadd.f32 %v305, %v206
  %v309 = vmax.f32 %v308, 0.0
  %v310 = vmax.f32 %v209, %v241
  %v311 = vmax.f32 %v277, %v309
  %v312 = vmax.f32 %v310, %v311
  %vm313 = vcmp.ge.f32.partialorder %v209, %v312
  %v314 = vsel %vm313, %v312, 0.0
  %vm315 = vcmp.ge.f32.partialorder %v241, %v312
  %vm316 = vcmp.lt.f32.partialorder %v209, %v312
  %vm317 = vmand %vm315, %vm316
  %v318 = vsel %vm317, %v312, 0.0
  %vm319 = vcmp.ge.f32.partialorder %v277, %v312
  %vm320 = vmand %vm319, %vm316
  %vm321 = vcmp.lt.f32.partialorder %v241, %v312
  %vm322 = vmand %vm320, %vm321
  %v323 = vsel %vm322, %v312, 0.0
  %vm324 = vcmp.ge.f32.partialorder %v309, %v312
  %vm325 = vmand %vm324, %vm316
  %vm326 = vmand %vm325, %vm321
  %vm327 = vcmp.lt.f32.partialorder %v277, %v312
  %vm328 = vmand %vm326, %vm327
  %v329 = vsel %vm328, %v312, 0.0
  %v330 = vpack.c.bf16 %v314, %v314
  %v332 = vperm.slane %v63, 0
  %vm334 = vcmask 64512
  %v336 = vsel %vm334, %v330, 0
  %vm338 = vcmask 1043456
  %v340 = vsel %vm338, %v61, 0
  %342 = vmatpush.bf16.msra.mxu0 0
  %343 = vmatpush.bf16.msra.mxu0 0
  %344 = vmatpush.bf16.msra.mxu0 0
  %345 = vmatpush.bf16.msra.mxu0 0
  %346 = vmatpush.bf16.msra.mxu0 0
  %347 = vmatpush.bf16.msra.mxu0 0
  %348 = vmatpush.bf16.msra.mxu0 0
  %349 = vmatpush.bf16.msra.mxu0 %v340
  %350 = vmatmul.bf16.gmra.mxu0 %v336
  %v351 = vpop.f32.mrf.mxu0
  %v352 = vadd.f32 %v332, %v351
  %v353 = vpop.f32.mrf.mxu0
  %354 = vdwg.mxu0
  %v355 = vpack.c.bf16 %v318, %v318
  %v357 = vsel %vm338, %v62, 0
  %359 = vmatpush.bf16.msra.mxu0 0
  %360 = vmatpush.bf16.msra.mxu0 0
  %361 = vmatpush.bf16.msra.mxu0 0
  %362 = vmatpush.bf16.msra.mxu0 0
  %363 = vmatpush.bf16.msra.mxu0 0
  %364 = vmatpush.bf16.msra.mxu0 0
  %365 = vmatpush.bf16.msra.mxu0 0
  %366 = vmatpush.bf16.msra.mxu0 %v357
  %367 = vmatmul.bf16.gmra.mxu0 %v336
  %v368 = vpop.f32.mrf.mxu0
  %v369 = vadd.f32 0.0, %v368
  %v370 = vpop.f32.mrf.mxu0
  %371 = vdwg.mxu0
  %v373 = vsel %vm334, %v355, 0
  %375 = vmatpush.bf16.msra.mxu0 0
  %376 = vmatpush.bf16.msra.mxu0 0
  %377 = vmatpush.bf16.msra.mxu0 0
  %378 = vmatpush.bf16.msra.mxu0 0
  %379 = vmatpush.bf16.msra.mxu0 0
  %380 = vmatpush.bf16.msra.mxu0 0
  %381 = vmatpush.bf16.msra.mxu0 0
  %382 = vmatpush.bf16.msra.mxu0 %v340
  %383 = vmatmul.bf16.gmra.mxu0 %v373
  %v384 = vpop.f32.mrf.mxu0
  %v385 = vadd.f32 %v369, %v384
  %v386 = vpop.f32.mrf.mxu0
  %387 = vdwg.mxu0
  %v388 = vadd.f32 %v385, %v332
  %389 = vmatpush.bf16.msra.mxu0 0
  %390 = vmatpush.bf16.msra.mxu0 0
  %391 = vmatpush.bf16.msra.mxu0 0
  %392 = vmatpush.bf16.msra.mxu0 0
  %393 = vmatpush.bf16.msra.mxu0 0
  %394 = vmatpush.bf16.msra.mxu0 0
  %395 = vmatpush.bf16.msra.mxu0 0
  %396 = vmatpush.bf16.msra.mxu0 %v357
  %397 = vmatmul.bf16.gmra.mxu0 %v373
  %v398 = vpop.f32.mrf.mxu0
  %v399 = vadd.f32 %v332, %v398
  %v400 = vpop.f32.mrf.mxu0
  %401 = vdwg.mxu0
  %v402 = vpack.c.bf16 %v323, %v323
  %v404 = vsel %vm334, %v402, 0
  %406 = vmatpush.bf16.msra.mxu0 0
  %407 = vmatpush.bf16.msra.mxu0 0
  %408 = vmatpush.bf16.msra.mxu0 0
  %409 = vmatpush.bf16.msra.mxu0 0
  %410 = vmatpush.bf16.msra.mxu0 0
  %411 = vmatpush.bf16.msra.mxu0 0
  %412 = vmatpush.bf16.msra.mxu0 0
  %413 = vmatpush.bf16.msra.mxu0 %v340
  %414 = vmatmul.bf16.gmra.mxu0 %v404
  %v415 = vpop.f32.mrf.mxu0
  %v416 = vadd.f32 %v332, %v415
  %v417 = vpop.f32.mrf.mxu0
  %418 = vdwg.mxu0
  %v419 = vpack.c.bf16 %v329, %v329
  %420 = vmatpush.bf16.msra.mxu0 0
  %421 = vmatpush.bf16.msra.mxu0 0
  %422 = vmatpush.bf16.msra.mxu0 0
  %423 = vmatpush.bf16.msra.mxu0 0
  %424 = vmatpush.bf16.msra.mxu0 0
  %425 = vmatpush.bf16.msra.mxu0 0
  %426 = vmatpush.bf16.msra.mxu0 0
  %427 = vmatpush.bf16.msra.mxu0 %v357
  %428 = vmatmul.bf16.gmra.mxu0 %v404
  %v429 = vpop.f32.mrf.mxu0
  %v430 = vadd.f32 0.0, %v429
  %v431 = vpop.f32.mrf.mxu0
  %432 = vdwg.mxu0
  %v434 = vsel %vm334, %v419, 0
  %436 = vmatpush.bf16.msra.mxu0 0
  %437 = vmatpush.bf16.msra.mxu0 0
  %438 = vmatpush.bf16.msra.mxu0 0
  %439 = vmatpush.bf16.msra.mxu0 0
  %440 = vmatpush.bf16.msra.mxu0 0
  %441 = vmatpush.bf16.msra.mxu0 0
  %442 = vmatpush.bf16.msra.mxu0 0
  %443 = vmatpush.bf16.msra.mxu0 %v340
  %444 = vmatmul.bf16.gmra.mxu0 %v434
  %v445 = vpop.f32.mrf.mxu0
  %v446 = vadd.f32 %v430, %v445
  %v447 = vpop.f32.mrf.mxu0
  %448 = vdwg.mxu0
  %v449 = vadd.f32 %v446, %v332
  %450 = vmatpush.bf16.msra.mxu0 0
  %451 = vmatpush.bf16.msra.mxu0 0
  %452 = vmatpush.bf16.msra.mxu0 0
  %453 = vmatpush.bf16.msra.mxu0 0
  %454 = vmatpush.bf16.msra.mxu0 0
  %455 = vmatpush.bf16.msra.mxu0 0
  %456 = vmatpush.bf16.msra.mxu0 0
  %457 = vmatpush.bf16.msra.mxu0 %v357
  %458 = vmatmul.bf16.gmra.mxu0 %v434
  %v459 = vpop.f32.mrf.mxu0
  %v460 = vadd.f32 %v332, %v459
  %v461 = vpop.f32.mrf.mxu0
  %462 = vdwg.mxu0
  %v463 = vpack.c.bf16 %v352, %v352
  %v465 = vperm.slane %v80, 0
  %v475 = vunpack.c.l.b16 %v64
  %v476 = vunpack.c.l.b16 %v65
  %v477 = vunpack.c.l.b16 %v66
  %v478 = vunpack.c.l.b16 %v67
  %v479 = vunpack.c.l.b16 %v68
  %v480 = vunpack.c.l.b16 %v69
  %v481 = vunpack.c.l.b16 %v70
  %v482 = vunpack.c.l.b16 %v71
  %v483 = vpack.c.b16 %v476, %v475
  %v484 = vpack.c.b16 %v478, %v477
  %v485 = vpack.c.b16 %v480, %v479
  %v486 = vpack.c.b16 %v482, %v481
  %v492 = vsel %vm148, %v463, 0
  %494 = vmatpush.bf16.msra.mxu0 0
  %495 = vmatpush.bf16.msra.mxu0 0
  %496 = vmatpush.bf16.msra.mxu0 0
  %497 = vmatpush.bf16.msra.mxu0 0
  %498 = vmatpush.bf16.msra.mxu0 %v486
  %499 = vmatpush.bf16.msra.mxu0 %v485
  %500 = vmatpush.bf16.msra.mxu0 %v484
  %501 = vmatpush.bf16.msra.mxu0 %v483
  %502 = vmatmul.bf16.gmra.mxu0 %v492
  %v503 = vpop.f32.mrf.mxu0
  %v504 = vadd.f32 %v465, %v503
  %v505 = vpop.f32.mrf.mxu0
  %506 = vdwg.mxu0
  %v507 = vpack.c.bf16 %v504, %v504
  %508 = vst [vmem:[%s12] sm:$0xf] %v507
  %v509 = vpack.c.bf16 %v388, %v388
  %v518 = vunpack.c.l.b16 %v72
  %v519 = vunpack.c.l.b16 %v73
  %v520 = vunpack.c.l.b16 %v74
  %v521 = vunpack.c.l.b16 %v75
  %v522 = vunpack.c.l.b16 %v76
  %v523 = vunpack.c.l.b16 %v77
  %v524 = vunpack.c.l.b16 %v78
  %v525 = vunpack.c.l.b16 %v79
  %v526 = vpack.c.b16 %v519, %v518
  %v527 = vpack.c.b16 %v521, %v520
  %v528 = vpack.c.b16 %v523, %v522
  %v529 = vpack.c.b16 %v525, %v524
  %534 = vmatpush.bf16.msra.mxu0 0
  %535 = vmatpush.bf16.msra.mxu0 0
  %536 = vmatpush.bf16.msra.mxu0 0
  %537 = vmatpush.bf16.msra.mxu0 0
  %538 = vmatpush.bf16.msra.mxu0 %v529
  %539 = vmatpush.bf16.msra.mxu0 %v528
  %540 = vmatpush.bf16.msra.mxu0 %v527
  %541 = vmatpush.bf16.msra.mxu0 %v526
  %542 = vmatmul.bf16.gmra.mxu0 %v492
  %v543 = vpop.f32.mrf.mxu0
  %v544 = vadd.f32 0.0, %v543
  %v545 = vpop.f32.mrf.mxu0
  %546 = vdwg.mxu0
  %v548 = vsel %vm148, %v509, 0
  %550 = vmatpush.bf16.msra.mxu0 0
  %551 = vmatpush.bf16.msra.mxu0 0
  %552 = vmatpush.bf16.msra.mxu0 0
  %553 = vmatpush.bf16.msra.mxu0 0
  %554 = vmatpush.bf16.msra.mxu0 %v486
  %555 = vmatpush.bf16.msra.mxu0 %v485
  %556 = vmatpush.bf16.msra.mxu0 %v484
  %557 = vmatpush.bf16.msra.mxu0 %v483
  %558 = vmatmul.bf16.gmra.mxu0 %v548
  %v559 = vpop.f32.mrf.mxu0
  %v560 = vadd.f32 %v544, %v559
  %v561 = vpop.f32.mrf.mxu0
  %562 = vdwg.mxu0
  %v563 = vadd.f32 %v560, %v465
  %v564 = vpack.c.bf16 %v563, %v563
  %s565 = scalar_lea.vmem %s12, 8
  %566 = vst [vmem:[%s565] sm:$0xf] %v564
  %v567 = vpack.c.bf16 %v399, %v399
  %568 = vmatpush.bf16.msra.mxu0 0
  %569 = vmatpush.bf16.msra.mxu0 0
  %570 = vmatpush.bf16.msra.mxu0 0
  %571 = vmatpush.bf16.msra.mxu0 0
  %572 = vmatpush.bf16.msra.mxu0 %v529
  %573 = vmatpush.bf16.msra.mxu0 %v528
  %574 = vmatpush.bf16.msra.mxu0 %v527
  %575 = vmatpush.bf16.msra.mxu0 %v526
  %576 = vmatmul.bf16.gmra.mxu0 %v548
  %v577 = vpop.f32.mrf.mxu0
  %v578 = vadd.f32 0.0, %v577
  %v579 = vpop.f32.mrf.mxu0
  %580 = vdwg.mxu0
  %v582 = vsel %vm148, %v567, 0
  %584 = vmatpush.bf16.msra.mxu0 0
  %585 = vmatpush.bf16.msra.mxu0 0
  %586 = vmatpush.bf16.msra.mxu0 0
  %587 = vmatpush.bf16.msra.mxu0 0
  %588 = vmatpush.bf16.msra.mxu0 %v486
  %589 = vmatpush.bf16.msra.mxu0 %v485
  %590 = vmatpush.bf16.msra.mxu0 %v484
  %591 = vmatpush.bf16.msra.mxu0 %v483
  %592 = vmatmul.bf16.gmra.mxu0 %v582
  %v593 = vpop.f32.mrf.mxu0
  %v594 = vadd.f32 %v578, %v593
  %v595 = vpop.f32.mrf.mxu0
  %596 = vdwg.mxu0
  %v597 = vadd.f32 %v594, %v465
  %v598 = vpack.c.bf16 %v597, %v597
  %s599 = scalar_lea.vmem %s12, 16
  %600 = vst [vmem:[%s599] sm:$0xf] %v598
  %601 = vmatpush.bf16.msra.mxu0 0
  %602 = vmatpush.bf16.msra.mxu0 0
  %603 = vmatpush.bf16.msra.mxu0 0
  %604 = vmatpush.bf16.msra.mxu0 0
  %605 = vmatpush.bf16.msra.mxu0 %v529
  %606 = vmatpush.bf16.msra.mxu0 %v528
  %607 = vmatpush.bf16.msra.mxu0 %v527
  %608 = vmatpush.bf16.msra.mxu0 %v526
  %609 = vmatmul.bf16.gmra.mxu0 %v582
  %v610 = vpop.f32.mrf.mxu0
  %v611 = vadd.f32 %v465, %v610
  %v612 = vpop.f32.mrf.mxu0
  %613 = vdwg.mxu0
  %v614 = vpack.c.bf16 %v611, %v611
  %s615 = scalar_lea.vmem %s12, 24
  %616 = vst [vmem:[%s615] sm:$0xf] %v614
  %v617 = vpack.c.bf16 %v416, %v416
  %v619 = vsel %vm148, %v617, 0
  %621 = vmatpush.bf16.msra.mxu0 0
  %622 = vmatpush.bf16.msra.mxu0 0
  %623 = vmatpush.bf16.msra.mxu0 0
  %624 = vmatpush.bf16.msra.mxu0 0
  %625 = vmatpush.bf16.msra.mxu0 %v486
  %626 = vmatpush.bf16.msra.mxu0 %v485
  %627 = vmatpush.bf16.msra.mxu0 %v484
  %628 = vmatpush.bf16.msra.mxu0 %v483
  %629 = vmatmul.bf16.gmra.mxu0 %v619
  %v630 = vpop.f32.mrf.mxu0
  %v631 = vadd.f32 %v465, %v630
  %v632 = vpop.f32.mrf.mxu0
  %633 = vdwg.mxu0
  %v634 = vpack.c.bf16 %v631, %v631
  %s635 = scalar_lea.vmem %s12, 4
  %636 = vst [vmem:[%s635] sm:$0xf] %v634
  %v637 = vpack.c.bf16 %v449, %v449
  %638 = vmatpush.bf16.msra.mxu0 0
  %639 = vmatpush.bf16.msra.mxu0 0
  %640 = vmatpush.bf16.msra.mxu0 0
  %641 = vmatpush.bf16.msra.mxu0 0
  %642 = vmatpush.bf16.msra.mxu0 %v529
  %643 = vmatpush.bf16.msra.mxu0 %v528
  %644 = vmatpush.bf16.msra.mxu0 %v527
  %645 = vmatpush.bf16.msra.mxu0 %v526
  %646 = vmatmul.bf16.gmra.mxu0 %v619
  %v647 = vpop.f32.mrf.mxu0
  %v648 = vadd.f32 0.0, %v647
  %v649 = vpop.f32.mrf.mxu0
  %650 = vdwg.mxu0
  %v652 = vsel %vm148, %v637, 0
  %654 = vmatpush.bf16.msra.mxu0 0
  %655 = vmatpush.bf16.msra.mxu0 0
  %656 = vmatpush.bf16.msra.mxu0 0
  %657 = vmatpush.bf16.msra.mxu0 0
  %658 = vmatpush.bf16.msra.mxu0 %v486
  %659 = vmatpush.bf16.msra.mxu0 %v485
  %660 = vmatpush.bf16.msra.mxu0 %v484
  %661 = vmatpush.bf16.msra.mxu0 %v483
  %662 = vmatmul.bf16.gmra.mxu0 %v652
  %v663 = vpop.f32.mrf.mxu0
  %v664 = vadd.f32 %v648, %v663
  %v665 = vpop.f32.mrf.mxu0
  %666 = vdwg.mxu0
  %v667 = vadd.f32 %v664, %v465
  %v668 = vpack.c.bf16 %v667, %v667
  %s669 = scalar_lea.vmem %s12, 12
  %670 = vst [vmem:[%s669] sm:$0xf] %v668
  %v671 = vpack.c.bf16 %v460, %v460
  %672 = vmatpush.bf16.msra.mxu0 0
  %673 = vmatpush.bf16.msra.mxu0 0
  %674 = vmatpush.bf16.msra.mxu0 0
  %675 = vmatpush.bf16.msra.mxu0 0
  %676 = vmatpush.bf16.msra.mxu0 %v529
  %677 = vmatpush.bf16.msra.mxu0 %v528
  %678 = vmatpush.bf16.msra.mxu0 %v527
  %679 = vmatpush.bf16.msra.mxu0 %v526
  %680 = vmatmul.bf16.gmra.mxu0 %v652
  %v681 = vpop.f32.mrf.mxu0
  %v682 = vadd.f32 0.0, %v681
  %v683 = vpop.f32.mrf.mxu0
  %684 = vdwg.mxu0
  %v686 = vsel %vm148, %v671, 0
  %688 = vmatpush.bf16.msra.mxu0 0
  %689 = vmatpush.bf16.msra.mxu0 0
  %690 = vmatpush.bf16.msra.mxu0 0
  %691 = vmatpush.bf16.msra.mxu0 0
  %692 = vmatpush.bf16.msra.mxu0 %v486
  %693 = vmatpush.bf16.msra.mxu0 %v485
  %694 = vmatpush.bf16.msra.mxu0 %v484
  %695 = vmatpush.bf16.msra.mxu0 %v483
  %696 = vmatmul.bf16.gmra.mxu0 %v686
  %v697 = vpop.f32.mrf.mxu0
  %v698 = vadd.f32 %v682, %v697
  %v699 = vpop.f32.mrf.mxu0
  %700 = vdwg.mxu0
  %v701 = vadd.f32 %v698, %v465
  %v702 = vpack.c.bf16 %v701, %v701
  %s703 = scalar_lea.vmem %s12, 20
  %704 = vst [vmem:[%s703] sm:$0xf] %v702
  %705 = vmatpush.bf16.msra.mxu0 0
  %706 = vmatpush.bf16.msra.mxu0 0
  %707 = vmatpush.bf16.msra.mxu0 0
  %708 = vmatpush.bf16.msra.mxu0 0
  %709 = vmatpush.bf16.msra.mxu0 %v529
  %710 = vmatpush.bf16.msra.mxu0 %v528
  %711 = vmatpush.bf16.msra.mxu0 %v527
  %712 = vmatpush.bf16.msra.mxu0 %v526
  %713 = vmatmul.bf16.gmra.mxu0 %v686
  %v714 = vpop.f32.mrf.mxu0
  %v715 = vadd.f32 %v465, %v714
  %v716 = vpop.f32.mrf.mxu0
  %717 = vdwg.mxu0
  %v718 = vpack.c.bf16 %v715, %v715
  %s719 = scalar_lea.vmem %s12, 28
  %720 = vst [vmem:[%s719] sm:$0xf] %v718
  // Predicated region
  $region50: #{net_forward.3} parent=0 // pred_check
    _
  $region51: #{net_forward.3} parent=0 // pred_check_branch
    %722 = sbr.rel (0) target = $region53
  $region52: #{net_forward.3} parent=0 // pred_region
    _
  $region53: #{net_forward.3} parent=0 // pred_fallthru
    _
  // Predicated region
  $region54: #{net_forward.3} parent=0 // pred_check
    _
  $region55: #{net_forward.3} parent=0 // pred_check_branch
    %724 = sbr.rel (0) target = $region57
  $region56: #{net_forward.3} parent=0 // pred_region
    _
  $region57: #{net_forward.3} parent=0 // pred_fallthru
    _

</llo_original>
